<compile_context>
chip_gen: v6e
topology: v6e:2x2x1
jax: 0.10.0
libtpu: 0.0.40
codegen_flags: <defaults>
</compile_context>

<pallas_src>
import functools
import numpy as np
import jax
import jax.numpy as jnp
from jax import lax
from jax.experimental import pallas as pl
from jax.experimental.pallas import tpu as pltpu


# ---------------------------------------------------------------------------
# Pallas kernel: bipartite GCN + attention pooling + concat, one batch block per grid step.
# ---------------------------------------------------------------------------
def _graph_encoder_kernel(
        x_s_ref, x_e_ref, adj_ref, ms_ref, me_ref,
        inv_deg_s_ref, inv_deg_e_ref, inv_cnt_s_ref, inv_cnt_e_ref,
        w_s_in_ref, b_s_in_ref, w_e_in_ref, b_e_in_ref,
        w_lyr_e_ref, b_lyr_e_ref, w_lyr_s_ref, b_lyr_s_ref,
        w_att_e_ref, w_att_s_ref,
        event_state_ref, strategy_state_ref):
    f32, bf16 = jnp.float32, jnp.bfloat16
    bb, Ns, _ = x_s_ref.shape
    _, Ne, _ = x_e_ref.shape
    L = w_lyr_e_ref.shape[0]
    F = w_lyr_e_ref.shape[-1]

    def fold_dot(x3_bf16, w_bf16):
        # Fold batch into the matmul M dim: one (bb*N, K) @ (K, F) MXU call, f32 accumulate.
        B_, N_, K_ = x3_bf16.shape
        y = jnp.dot(x3_bf16.reshape(B_ * N_, K_), w_bf16, preferred_element_type=f32)
        return y.reshape(B_, N_, w_bf16.shape[-1])

    m_s = ms_ref[...]                       # (bb, Ns, 1) f32
    m_e = me_ref[...]                       # (bb, Ne, 1) f32
    inv_deg_s = inv_deg_s_ref[...]          # (bb, Ns, 1) exact host-side reciprocals
    inv_deg_e = inv_deg_e_ref[...]          # (bb, Ne, 1)

    # Adjacency arrives already in bf16 (0/1 exact); build the transposed view ONCE per grid
    # step, outside the layer loop (route through f32 for robust XLU transpose lowering).
    adj_b = adj_ref[...]                                            # (bb, Ns, Ne) bf16
    adj_t_b = jnp.swapaxes(adj_b.astype(f32), 1, 2).astype(bf16)    # (bb, Ne, Ns) bf16

    # Input embedding for both node sets (strategy / event sides), ReLU, masked.
    s = jnp.maximum(fold_dot(x_s_ref[...].astype(bf16), w_s_in_ref[...]) + b_s_in_ref[...],
                    0.0) * m_s
    e = jnp.maximum(fold_dot(x_e_ref[...].astype(bf16), w_e_in_ref[...]) + b_e_in_ref[...],
                    0.0) * m_e

    # TODO(synk): BipartiteGCN internals are not provided; alternating mean-aggregation
    #             bipartite layers (message weight + self weight, ReLU, batch_norm=False) assumed.
    def layer(l, carry):
        s, e = carry
        s_b = s.astype(bf16)                # cast once, reused for einsum below
        # strategies -> events: neighbor mean, then one fused K=2F dot (msg ++ self) @ W_e[l]
        msg_e = jnp.einsum('bes,bsf->bef', adj_t_b, s_b,
                           preferred_element_type=f32) * inv_deg_e
        h_e = jnp.concatenate([msg_e, e], axis=-1).astype(bf16)     # (bb, Ne, 2F), lane-dense K
        e = jnp.maximum(fold_dot(h_e, w_lyr_e_ref[l]) + b_lyr_e_ref[l], 0.0) * m_e
        # events -> strategies
        e_b = e.astype(bf16)
        msg_s = jnp.einsum('bse,bef->bsf', adj_b, e_b,
                           preferred_element_type=f32) * inv_deg_s
        h_s = jnp.concatenate([msg_s, s], axis=-1).astype(bf16)     # (bb, Ns, 2F)
        s = jnp.maximum(fold_dot(h_s, w_lyr_s_ref[l]) + b_lyr_s_ref[l], 0.0) * m_s
        return (s, e)

    s, e = lax.fori_loop(0, L, layer, (s, e))

    # TODO(synk): GraphAttentionPooling body assumed (SimGNN-style):
    #             masked mean -> tanh(W) -> sigmoid gate -> weighted sum.
    def att_pool(x, mask, inv_cnt, w_att):
        mean = jnp.sum(x * mask, axis=1) * inv_cnt[:, 0, :]                  # (bb, F)
        tg = jnp.tanh(jnp.dot(mean.astype(bf16), w_att,
                              preferred_element_type=f32))                   # (bb, F)
        z = jnp.sum(x * tg[:, None, :], axis=-1, keepdims=True)             # (bb, N, 1)
        coefs = 1.0 / (1.0 + jnp.exp(-z))                                    # sigmoid, f32
        return jnp.sum(coefs * x * mask, axis=1)                             # (bb, F)

    pooled_e = att_pool(e, m_e, inv_cnt_e_ref[...], w_att_e_ref[...])
    pooled_s = att_pool(s, m_s, inv_cnt_s_ref[...], w_att_s_ref[...])

    # In-register concat(node_feat, broadcast(pooled)); stores are lane-dense (2F = 128 lanes).
    out_dt = event_state_ref.dtype
    event_state_ref[...] = jnp.concatenate(
        [e, jnp.broadcast_to(pooled_e[:, None, :], (bb, Ne, F))], axis=-1).astype(out_dt)
    strategy_state_ref[...] = jnp.concatenate(
        [s, jnp.broadcast_to(pooled_s[:, None, :], (bb, Ns, F))], axis=-1).astype(out_dt)


def _derive_vmem_limit_bytes():
    # Per-generation VMEM budget: <= 3/4 of physical per-core VMEM, capped at 96 MiB
    # (v7x: 64 MiB/TC -> 48 MiB; v5e/v6e: 128 MiB -> 96 MiB).
    try:
        cap = int(pltpu.get_tpu_info().vmem_capacity_bytes)
    except Exception:
        cap = 64 * 1024 * 1024
    return int(min(cap * 3 // 4, 96 * 1024 * 1024))


@functools.partial(jax.jit, static_argnames=("batch_block", "out_dtype"))
def graph_encoder_forward(x_s, x_e, adj, mask_s, mask_e,
                          inv_deg_s, inv_deg_e, inv_cnt_s, inv_cnt_e,
                          params, batch_block=None, out_dtype=jnp.float32):
    """Returns (event_state_feat [B, Ne, 2F], strategy_state_feat [B, Ns, 2F])."""
    (w_s_in, b_s_in, w_e_in, b_e_in,
     w_lyr_e, b_lyr_e, w_lyr_s, b_lyr_s,
     w_att_e, w_att_s) = params
    B, Ns, Ds = x_s.shape
    _, Ne, De = x_e.shape
    F = w_s_in.shape[1]
    L = w_lyr_e.shape[0]

    # Default: >= 2 grid steps so adjacency DMA overlaps compute, and v7x's two TensorCores
    # both get work on the leading "parallel" axis. Pass batch_block explicitly to override.
    bb = max(1, B // 2) if batch_block is None else batch_block
    grid = (pl.cdiv(B, bb),)

    def batched(shape):
        nd = len(shape)
        return pl.BlockSpec((bb,) + tuple(shape[1:]), lambda i, _nd=nd: (i,) + (0,) * (_nd - 1))

    def rep(shape):
        nd = len(shape)
        return pl.BlockSpec(tuple(shape), lambda i, _nd=nd: (0,) * _nd)

    in_specs = [
        batched(x_s.shape), batched(x_e.shape), batched(adj.shape),
        batched(mask_s.shape), batched(mask_e.shape),
        batched(inv_deg_s.shape), batched(inv_deg_e.shape),
        batched(inv_cnt_s.shape), batched(inv_cnt_e.shape),
        rep(w_s_in.shape), rep(b_s_in.shape), rep(w_e_in.shape), rep(b_e_in.shape),
        rep(w_lyr_e.shape), rep(b_lyr_e.shape), rep(w_lyr_s.shape), rep(b_lyr_s.shape),
        rep(w_att_e.shape), rep(w_att_s.shape),
    ]
    out_specs = (pl.BlockSpec((bb, Ne, 2 * F), lambda i: (i, 0, 0)),
                 pl.BlockSpec((bb, Ns, 2 * F), lambda i: (i, 0, 0)))

    out_itemsize = jnp.dtype(out_dtype).itemsize
    flops = int(
        2 * B * (Ns * Ds + Ne * De) * F                       # input embeddings
        + 2 * B * L * (2 * Ns * Ne * F                        # two neighbor aggregations / layer
                       + (Ns + Ne) * (2 * F) * F)             # two fused K=2F dense dots / layer
        + 2 * B * 2 * F * F)                                  # attention projections
    transcendentals = int(B * (2 * F + Ns + Ne))              # tanh + sigmoid
    bytes_accessed = int(
        (x_s.size + x_e.size) * 4 + adj.size * 2
        + (mask_s.size + mask_e.size + inv_deg_s.size + inv_deg_e.size
           + inv_cnt_s.size + inv_cnt_e.size) * 4
        + sum(int(w.size) * w.dtype.itemsize for w in params)
        + (B * Ne * 2 * F + B * Ns * 2 * F) * out_itemsize)

    event_state, strategy_state = pl.pallas_call(
        _graph_encoder_kernel,
        out_shape=(jax.ShapeDtypeStruct((B, Ne, 2 * F), out_dtype),
                   jax.ShapeDtypeStruct((B, Ns, 2 * F), out_dtype)),
        grid=grid,
        in_specs=in_specs,
        out_specs=out_specs,
        compiler_params=pltpu.CompilerParams(
            dimension_semantics=("parallel",),
            vmem_limit_bytes=_derive_vmem_limit_bytes()),
        cost_estimate=pl.CostEstimate(flops=flops, transcendentals=transcendentals,
                                      bytes_accessed=bytes_accessed),
    )(x_s, x_e, adj, mask_s, mask_e,
      inv_deg_s, inv_deg_e, inv_cnt_s, inv_cnt_e,
      w_s_in, b_s_in, w_e_in, b_e_in,
      w_lyr_e, b_lyr_e, w_lyr_s, b_lyr_s,
      w_att_e, w_att_s)
    return event_state, strategy_state


# ---------------------------------------------------------------------------
# Pure-JAX reference (same math), used for the sanity check in __main__.
# ---------------------------------------------------------------------------
def graph_encoder_reference(x_s, x_e, adj, mask_s, mask_e,
                            inv_deg_s, inv_deg_e, inv_cnt_s, inv_cnt_e, params):
    (w_s_in, b_s_in, w_e_in, b_e_in,
     w_lyr_e, b_lyr_e, w_lyr_s, b_lyr_s, w_att_e, w_att_s) = params
    bf16, f32 = jnp.bfloat16, jnp.float32
    L, F = w_lyr_e.shape[0], w_lyr_e.shape[-1]
    B, Ns, _ = x_s.shape
    Ne = x_e.shape[1]
    adj_t = jnp.swapaxes(adj, 1, 2)

    def fdot(x, w, b):
        y = jnp.einsum("bnk,kf->bnf", x.astype(bf16), w, preferred_element_type=f32)
        return y + b

    s = jnp.maximum(fdot(x_s, w_s_in, b_s_in), 0.0) * mask_s
    e = jnp.maximum(fdot(x_e, w_e_in, b_e_in), 0.0) * mask_e
    for l in range(L):
        msg_e = jnp.einsum("bes,bsf->bef", adj_t, s.astype(bf16),
                           preferred_element_type=f32) * inv_deg_e
        h_e = jnp.concatenate([msg_e, e], axis=-1)
        e = jnp.maximum(fdot(h_e, w_lyr_e[l], b_lyr_e[l]), 0.0) * mask_e
        msg_s = jnp.einsum("bse,bef->bsf", adj, e.astype(bf16),
                           preferred_element_type=f32) * inv_deg_s
        h_s = jnp.concatenate([msg_s, s], axis=-1)
        s = jnp.maximum(fdot(h_s, w_lyr_s[l], b_lyr_s[l]), 0.0) * mask_s

    def pool(x, mask, inv_cnt, w_att):
        mean = jnp.sum(x * mask, axis=1) * inv_cnt[:, 0, :]
        tg = jnp.tanh(jnp.dot(mean.astype(bf16), w_att, preferred_element_type=f32))
        z = jnp.sum(x * tg[:, None, :], axis=-1, keepdims=True)
        coefs = 1.0 / (1.0 + jnp.exp(-z))
        return jnp.sum(coefs * x * mask, axis=1)

    pe = pool(e, mask_e, inv_cnt_e, w_att_e)
    ps = pool(s, mask_s, inv_cnt_s, w_att_s)
    ev = jnp.concatenate([e, jnp.broadcast_to(pe[:, None, :], (B, Ne, F))], axis=-1)
    st = jnp.concatenate([s, jnp.broadcast_to(ps[:, None, :], (B, Ns, F))], axis=-1)
    return ev, st


# ---------------------------------------------------------------------------
# Host-side preprocessing: matrix2graph + merge_graphs + to_dense_batch equivalent.
# Adjacency is emitted in bf16 (0/1 exact); degree/count reciprocals are precomputed exactly.
# For production sizes, pad num_strategies/num_events to multiples of 128 to feed the MXU.
# ---------------------------------------------------------------------------
def build_dense_bipartite_batch(matrixes, num_strategies, num_events):
    """matrixes: list of dense (ns_i, ne_i) float arrays (the dense view of the sparse inputs)."""
    B = len(matrixes)
    x_s = np.zeros((B, num_strategies, 8), np.float32)   # strategy feats [1,0,0], padded to 8
    x_e = np.zeros((B, num_events, 8), np.float32)       # event feats [0,±,∓,|val|], padded to 8
    adj = np.zeros((B, num_strategies, num_events), np.float32)
    mask_s = np.zeros((B, num_strategies, 1), np.float32)
    mask_e = np.zeros((B, num_events, 1), np.float32)
    for b, m in enumerate(matrixes):
        ns, ne = m.shape
        x_s[b, :ns, 0] = 1.0                              # x += [1, 0, 0]
        mask_s[b, :ns, 0] = 1.0
        mask_e[b, :ne, 0] = 1.0
        rows, cols = np.nonzero(m)
        for i, j in zip(rows, cols):                      # same per-edge overwrite semantics
            v = float(m[i, j])
            if v > 0:
                x_e[b, j, :4] = [0.0, 1.0, 0.0, v]
            elif v < 0:
                x_e[b, j, :4] = [0.0, 0.0, 1.0, -v]
            adj[b, i, j] = 1.0
    inv_deg_s = 1.0 / np.maximum(adj.sum(axis=2, keepdims=True), 1.0)        # (B, Ns, 1)
    inv_deg_e = 1.0 / np.maximum(adj.sum(axis=1)[..., None], 1.0)            # (B, Ne, 1)
    inv_cnt_s = 1.0 / np.maximum(mask_s.sum(axis=1, keepdims=True), 1.0)     # (B, 1, 1)
    inv_cnt_e = 1.0 / np.maximum(mask_e.sum(axis=1, keepdims=True), 1.0)     # (B, 1, 1)
    return (jnp.asarray(x_s), jnp.asarray(x_e),
            jnp.asarray(adj, dtype=jnp.bfloat16),
            jnp.asarray(mask_s), jnp.asarray(mask_e),
            jnp.asarray(inv_deg_s), jnp.asarray(inv_deg_e),
            jnp.asarray(inv_cnt_s), jnp.asarray(inv_cnt_e))


def init_params(key, d_s, d_e, hidden, num_layers):
    """nn.Linear-style uniform init. Message+self weights are pre-stacked as (L, 2F, F) so each
    GCN side is one lane-dense K=2F MXU dot; MXU operands stored bf16, biases f32."""
    ks = jax.random.split(key, 12)

    def lin(k, fan_in, shape, dtype=jnp.float32):
        s = 1.0 / np.sqrt(fan_in)
        return jax.random.uniform(k, shape, jnp.float32, -s, s).astype(dtype)

    bf16 = jnp.bfloat16
    w_s_in = lin(ks[0], d_s, (d_s, hidden), bf16)
    b_s_in = lin(ks[1], d_s, (1, hidden))
    w_e_in = lin(ks[2], d_e, (d_e, hidden), bf16)
    b_e_in = lin(ks[3], d_e, (1, hidden))
    w_se = lin(ks[4], hidden, (num_layers, hidden, hidden))
    w_ee = lin(ks[5], hidden, (num_layers, hidden, hidden))
    w_lyr_e = jnp.concatenate([w_se, w_ee], axis=1).astype(bf16)   # (L, 2F, F): [message ; self]
    b_e_lyr = lin(ks[6], hidden, (num_layers, 1, hidden))
    w_es = lin(ks[7], hidden, (num_layers, hidden, hidden))
    w_ss = lin(ks[8], hidden, (num_layers, hidden, hidden))
    w_lyr_s = jnp.concatenate([w_es, w_ss], axis=1).astype(bf16)   # (L, 2F, F)
    b_s_lyr = lin(ks[9], hidden, (num_layers, 1, hidden))
    w_att_e = lin(ks[10], hidden, (hidden, hidden), bf16)
    w_att_s = lin(ks[11], hidden, (hidden, hidden), bf16)
    return (w_s_in, b_s_in, w_e_in, b_e_in,
            w_lyr_e, b_e_lyr, w_lyr_s, b_s_lyr,
            w_att_e, w_att_s)


if __name__ == "__main__":
    B = 2
    NS, NE = 16, 16      # padded strategy / event node counts (multiples of 8)
    HIDDEN = 64          # node_output_size -> concat output width = 128 (lane-dense)
    LAYERS = 3           # GraphEncoder default num_layers=10; small value for the demo

    root = jax.random.PRNGKey(0)
    k_val, k_msk, k_par = jax.random.split(root, 3)
    dense = np.asarray(jax.random.normal(k_val, (B, NS, NE), jnp.float32))
    keep = np.asarray(jax.random.uniform(k_msk, (B, NS, NE)) < 0.25)
    sparse = np.where(keep, dense, 0.0).astype(np.float32)
    # Two graphs of different sizes to exercise the to_dense_batch-style padding/masking.
    matrixes = [sparse[0][:12, :14], sparse[1]]

    (x_s, x_e, adj, mask_s, mask_e,
     inv_deg_s, inv_deg_e, inv_cnt_s, inv_cnt_e) = build_dense_bipartite_batch(matrixes, NS, NE)
    params = init_params(k_par, d_s=x_s.shape[-1], d_e=x_e.shape[-1],
                         hidden=HIDDEN, num_layers=LAYERS)

    event_state_feat, strategy_state_feat = graph_encoder_forward(
        x_s, x_e, adj, mask_s, mask_e,
        inv_deg_s, inv_deg_e, inv_cnt_s, inv_cnt_e, params)
    jax.block_until_ready((event_state_feat, strategy_state_feat))

    # Shape / finiteness / numerical checks against the pure-JAX reference.
    assert event_state_feat.shape == (B, NE, 2 * HIDDEN)
    assert strategy_state_feat.shape == (B, NS, 2 * HIDDEN)
    assert bool(jnp.all(jnp.isfinite(event_state_feat)))
    assert bool(jnp.all(jnp.isfinite(strategy_state_feat)))

    ev_ref, st_ref = graph_encoder_reference(
        x_s, x_e, adj, mask_s, mask_e,
        inv_deg_s, inv_deg_e, inv_cnt_s, inv_cnt_e, params)
    assert bool(jnp.allclose(event_state_feat, ev_ref, rtol=5e-2, atol=5e-2))
    assert bool(jnp.allclose(strategy_state_feat, st_ref, rtol=5e-2, atol=5e-2))

    print("KERNEL_OK")
</pallas_src>

<mosaic_0001>
module attributes {stable_mosaic.version = 11 : i64} {
  func.func @_graph_encoder_kernel(%arg0: i32, %arg1: memref<1x16x8xf32, #tpu.memory_space<vmem>>, %arg2: memref<1x16x8xf32, #tpu.memory_space<vmem>>, %arg3: memref<1x16x16xbf16, #tpu.memory_space<vmem>>, %arg4: memref<1x16x1xf32, #tpu.memory_space<vmem>>, %arg5: memref<1x16x1xf32, #tpu.memory_space<vmem>>, %arg6: memref<1x16x1xf32, #tpu.memory_space<vmem>>, %arg7: memref<1x16x1xf32, #tpu.memory_space<vmem>>, %arg8: memref<1x1x1xf32, #tpu.memory_space<vmem>>, %arg9: memref<1x1x1xf32, #tpu.memory_space<vmem>>, %arg10: memref<8x64xbf16, #tpu.memory_space<vmem>>, %arg11: memref<1x64xf32, #tpu.memory_space<vmem>>, %arg12: memref<8x64xbf16, #tpu.memory_space<vmem>>, %arg13: memref<1x64xf32, #tpu.memory_space<vmem>>, %arg14: memref<3x128x64xbf16, #tpu.memory_space<vmem>>, %arg15: memref<3x1x64xf32, #tpu.memory_space<vmem>>, %arg16: memref<3x128x64xbf16, #tpu.memory_space<vmem>>, %arg17: memref<3x1x64xf32, #tpu.memory_space<vmem>>, %arg18: memref<64x64xbf16, #tpu.memory_space<vmem>>, %arg19: memref<64x64xbf16, #tpu.memory_space<vmem>>, %arg20: memref<1x16x128xf32, #tpu.memory_space<vmem>>, %arg21: memref<1x16x128xf32, #tpu.memory_space<vmem>>) attributes {dimension_semantics = [#tpu.dimension_semantics<parallel>], iteration_bounds = array<i64: 2>, scalar_prefetch = 0 : i64, scratch_operands = 0 : i64, tpu.core_type = #tpu.core_type<tc>, window_params = [{transform_indices = @transform_0, window_bounds = array<i64: 1, 16, 8>}, {transform_indices = @transform_1, window_bounds = array<i64: 1, 16, 8>}, {transform_indices = @transform_2, window_bounds = array<i64: 1, 16, 16>}, {transform_indices = @transform_3, window_bounds = array<i64: 1, 16, 1>}, {transform_indices = @transform_4, window_bounds = array<i64: 1, 16, 1>}, {transform_indices = @transform_5, window_bounds = array<i64: 1, 16, 1>}, {transform_indices = @transform_6, window_bounds = array<i64: 1, 16, 1>}, {transform_indices = @transform_7, window_bounds = array<i64: 1, 1, 1>}, {transform_indices = @transform_8, window_bounds = array<i64: 1, 1, 1>}, {pipeline_mode = #tpu.pipeline_mode<synchronous>, transform_indices = @transform_9, window_bounds = array<i64: 8, 64>}, {pipeline_mode = #tpu.pipeline_mode<synchronous>, transform_indices = @transform_10, window_bounds = array<i64: 1, 64>}, {pipeline_mode = #tpu.pipeline_mode<synchronous>, transform_indices = @transform_11, window_bounds = array<i64: 8, 64>}, {pipeline_mode = #tpu.pipeline_mode<synchronous>, transform_indices = @transform_12, window_bounds = array<i64: 1, 64>}, {pipeline_mode = #tpu.pipeline_mode<synchronous>, transform_indices = @transform_13, window_bounds = array<i64: 3, 128, 64>}, {pipeline_mode = #tpu.pipeline_mode<synchronous>, transform_indices = @transform_14, window_bounds = array<i64: 3, 1, 64>}, {pipeline_mode = #tpu.pipeline_mode<synchronous>, transform_indices = @transform_15, window_bounds = array<i64: 3, 128, 64>}, {pipeline_mode = #tpu.pipeline_mode<synchronous>, transform_indices = @transform_16, window_bounds = array<i64: 3, 1, 64>}, {pipeline_mode = #tpu.pipeline_mode<synchronous>, transform_indices = @transform_17, window_bounds = array<i64: 64, 64>}, {pipeline_mode = #tpu.pipeline_mode<synchronous>, transform_indices = @transform_18, window_bounds = array<i64: 64, 64>}, {transform_indices = @transform_19, window_bounds = array<i64: 1, 16, 128>}, {transform_indices = @transform_20, window_bounds = array<i64: 1, 16, 128>}]} {
    %c0 = arith.constant 0 : index
    %c0_0 = arith.constant 0 : index
    %c0_1 = arith.constant 0 : index
    %0 = vector.load %arg4[%c0, %c0_0, %c0_1] : memref<1x16x1xf32, #tpu.memory_space<vmem>>, vector<1x16x1xf32>
    %c0_2 = arith.constant 0 : index
    %c0_3 = arith.constant 0 : index
    %c0_4 = arith.constant 0 : index
    %1 = vector.load %arg5[%c0_2, %c0_3, %c0_4] : memref<1x16x1xf32, #tpu.memory_space<vmem>>, vector<1x16x1xf32>
    %c0_5 = arith.constant 0 : index
    %c0_6 = arith.constant 0 : index
    %c0_7 = arith.constant 0 : index
    %2 = vector.load %arg6[%c0_5, %c0_6, %c0_7] : memref<1x16x1xf32, #tpu.memory_space<vmem>>, vector<1x16x1xf32>
    %c0_8 = arith.constant 0 : index
    %c0_9 = arith.constant 0 : index
    %c0_10 = arith.constant 0 : index
    %3 = vector.load %arg7[%c0_8, %c0_9, %c0_10] : memref<1x16x1xf32, #tpu.memory_space<vmem>>, vector<1x16x1xf32>
    %c0_11 = arith.constant 0 : index
    %c0_12 = arith.constant 0 : index
    %c0_13 = arith.constant 0 : index
    %4 = vector.load %arg3[%c0_11, %c0_12, %c0_13] : memref<1x16x16xbf16, #tpu.memory_space<vmem>>, vector<1x16x16xbf16>
    %5 = arith.extf %4 : vector<1x16x16xbf16> to vector<1x16x16xf32>
    %6 = tpu.transpose %5, [0, 2, 1] : vector<1x16x16xf32> -> vector<1x16x16xf32>
    %7 = arith.truncf %6 : vector<1x16x16xf32> to vector<1x16x16xbf16>
    %c0_14 = arith.constant 0 : index
    %c0_15 = arith.constant 0 : index
    %c0_16 = arith.constant 0 : index
    %8 = vector.load %arg1[%c0_14, %c0_15, %c0_16] : memref<1x16x8xf32, #tpu.memory_space<vmem>>, vector<1x16x8xf32>
    %9 = arith.truncf %8 : vector<1x16x8xf32> to vector<1x16x8xbf16>
    %c0_17 = arith.constant 0 : index
    %c0_18 = arith.constant 0 : index
    %10 = vector.load %arg10[%c0_17, %c0_18] : memref<8x64xbf16, #tpu.memory_space<vmem>>, vector<8x64xbf16>
    %11 = vector.shape_cast %9 : vector<1x16x8xbf16> to vector<16x8xbf16>
    %cst = arith.constant dense<0.000000e+00> : vector<16x64xf32>
    %12 = tpu.matmul %11, %10, %cst {dimension_numbers = #tpu.dot_dimension_numbers<[1], [0], [0], [1], [0, 0, 1, 1], [], []>} : vector<16x8xbf16>, vector<8x64xbf16>, vector<16x64xf32> -> vector<16x64xf32>
    %13 = vector.shape_cast %12 : vector<16x64xf32> to vector<1x16x64xf32>
    %c0_19 = arith.constant 0 : index
    %c0_20 = arith.constant 0 : index
    %14 = vector.load %arg11[%c0_19, %c0_20] : memref<1x64xf32, #tpu.memory_space<vmem>>, vector<1x64xf32>
    %15 = vector.shape_cast %14 : vector<1x64xf32> to vector<1x1x64xf32>
    %16 = vector.broadcast %15 : vector<1x1x64xf32> to vector<1x16x64xf32>
    %17 = arith.addf %13, %16 : vector<1x16x64xf32>
    %cst_21 = arith.constant 0.000000e+00 : f32
    %18 = vector.broadcast %cst_21 : f32 to vector<1x16x64xf32>
    %19 = arith.maximumf %17, %18 : vector<1x16x64xf32>
    %20 = vector.broadcast %0 : vector<1x16x1xf32> to vector<1x16x64xf32>
    %21 = arith.mulf %19, %20 : vector<1x16x64xf32>
    %c0_22 = arith.constant 0 : index
    %c0_23 = arith.constant 0 : index
    %c0_24 = arith.constant 0 : index
    %22 = vector.load %arg2[%c0_22, %c0_23, %c0_24] : memref<1x16x8xf32, #tpu.memory_space<vmem>>, vector<1x16x8xf32>
    %23 = arith.truncf %22 : vector<1x16x8xf32> to vector<1x16x8xbf16>
    %c0_25 = arith.constant 0 : index
    %c0_26 = arith.constant 0 : index
    %24 = vector.load %arg12[%c0_25, %c0_26] : memref<8x64xbf16, #tpu.memory_space<vmem>>, vector<8x64xbf16>
    %25 = vector.shape_cast %23 : vector<1x16x8xbf16> to vector<16x8xbf16>
    %cst_27 = arith.constant dense<0.000000e+00> : vector<16x64xf32>
    %26 = tpu.matmul %25, %24, %cst_27 {dimension_numbers = #tpu.dot_dimension_numbers<[1], [0], [0], [1], [0, 0, 1, 1], [], []>} : vector<16x8xbf16>, vector<8x64xbf16>, vector<16x64xf32> -> vector<16x64xf32>
    %27 = vector.shape_cast %26 : vector<16x64xf32> to vector<1x16x64xf32>
    %c0_28 = arith.constant 0 : index
    %c0_29 = arith.constant 0 : index
    %28 = vector.load %arg13[%c0_28, %c0_29] : memref<1x64xf32, #tpu.memory_space<vmem>>, vector<1x64xf32>
    %29 = vector.shape_cast %28 : vector<1x64xf32> to vector<1x1x64xf32>
    %30 = vector.broadcast %29 : vector<1x1x64xf32> to vector<1x16x64xf32>
    %31 = arith.addf %27, %30 : vector<1x16x64xf32>
    %cst_30 = arith.constant 0.000000e+00 : f32
    %32 = vector.broadcast %cst_30 : f32 to vector<1x16x64xf32>
    %33 = arith.maximumf %31, %32 : vector<1x16x64xf32>
    %34 = vector.broadcast %1 : vector<1x16x1xf32> to vector<1x16x64xf32>
    %35 = arith.mulf %33, %34 : vector<1x16x64xf32>
    %c0_i32 = arith.constant 0 : i32
    %c3_i32 = arith.constant 3 : i32
    %36 = arith.addi %c0_i32, %c3_i32 : i32
    %c1_i32 = arith.constant 1 : i32
    %37:2 = scf.for %arg22 = %c0_i32 to %36 step %c1_i32 iter_args(%arg23 = %21, %arg24 = %35) -> (vector<1x16x64xf32>, vector<1x16x64xf32>)  : i32 {
      %104 = arith.truncf %arg23 : vector<1x16x64xf32> to vector<1x16x64xbf16>
      "tpu.trace_start"() <{level = 10 : i32, message = "bes,bsf->bef"}> : () -> ()
      %cst_62 = arith.constant dense<0.000000e+00> : vector<1x16x64xf32>
      %105 = tpu.matmul %7, %104, %cst_62 {dimension_numbers = #tpu.dot_dimension_numbers<[2], [1], [1], [2], [0, 0, 0, 1, 1, 2], [0], [0]>} : vector<1x16x16xbf16>, vector<1x16x64xbf16>, vector<1x16x64xf32> -> vector<1x16x64xf32>
      "tpu.trace_stop"() : () -> ()
      %106 = vector.broadcast %3 : vector<1x16x1xf32> to vector<1x16x64xf32>
      %107 = arith.mulf %105, %106 : vector<1x16x64xf32>
      %108 = tpu.concatenate %107, %arg24 in 2 : vector<1x16x64xf32>, vector<1x16x64xf32> -> vector<1x16x128xf32>
      %109 = arith.truncf %108 : vector<1x16x128xf32> to vector<1x16x128xbf16>
      %110 = arith.index_cast %arg22 : i32 to index
      %c0_63 = arith.constant 0 : index
      %c0_64 = arith.constant 0 : index
      %111 = vector.load %arg14[%110, %c0_63, %c0_64] : memref<3x128x64xbf16, #tpu.memory_space<vmem>>, vector<1x128x64xbf16>
      %112 = vector.shape_cast %111 : vector<1x128x64xbf16> to vector<128x64xbf16>
      %113 = vector.shape_cast %109 : vector<1x16x128xbf16> to vector<16x128xbf16>
      %cst_65 = arith.constant dense<0.000000e+00> : vector<16x64xf32>
      %114 = tpu.matmul %113, %112, %cst_65 {dimension_numbers = #tpu.dot_dimension_numbers<[1], [0], [0], [1], [0, 0, 1, 1], [], []>} : vector<16x128xbf16>, vector<128x64xbf16>, vector<16x64xf32> -> vector<16x64xf32>
      %115 = vector.shape_cast %114 : vector<16x64xf32> to vector<1x16x64xf32>
      %116 = arith.index_cast %arg22 : i32 to index
      %c0_66 = arith.constant 0 : index
      %c0_67 = arith.constant 0 : index
      %117 = vector.load %arg15[%116, %c0_66, %c0_67] : memref<3x1x64xf32, #tpu.memory_space<vmem>>, vector<1x1x64xf32>
      %118 = vector.shape_cast %117 : vector<1x1x64xf32> to vector<1x64xf32>
      %119 = vector.shape_cast %118 : vector<1x64xf32> to vector<1x1x64xf32>
      %120 = vector.broadcast %119 : vector<1x1x64xf32> to vector<1x16x64xf32>
      %121 = arith.addf %115, %120 : vector<1x16x64xf32>
      %cst_68 = arith.constant 0.000000e+00 : f32
      %122 = vector.broadcast %cst_68 : f32 to vector<1x16x64xf32>
      %123 = arith.maximumf %121, %122 : vector<1x16x64xf32>
      %124 = vector.broadcast %1 : vector<1x16x1xf32> to vector<1x16x64xf32>
      %125 = arith.mulf %123, %124 : vector<1x16x64xf32>
      %126 = arith.truncf %125 : vector<1x16x64xf32> to vector<1x16x64xbf16>
      "tpu.trace_start"() <{level = 10 : i32, message = "bse,bef->bsf"}> : () -> ()
      %cst_69 = arith.constant dense<0.000000e+00> : vector<1x16x64xf32>
      %127 = tpu.matmul %4, %126, %cst_69 {dimension_numbers = #tpu.dot_dimension_numbers<[2], [1], [1], [2], [0, 0, 0, 1, 1, 2], [0], [0]>} : vector<1x16x16xbf16>, vector<1x16x64xbf16>, vector<1x16x64xf32> -> vector<1x16x64xf32>
      "tpu.trace_stop"() : () -> ()
      %128 = vector.broadcast %2 : vector<1x16x1xf32> to vector<1x16x64xf32>
      %129 = arith.mulf %127, %128 : vector<1x16x64xf32>
      %130 = tpu.concatenate %129, %arg23 in 2 : vector<1x16x64xf32>, vector<1x16x64xf32> -> vector<1x16x128xf32>
      %131 = arith.truncf %130 : vector<1x16x128xf32> to vector<1x16x128xbf16>
      %132 = arith.index_cast %arg22 : i32 to index
      %c0_70 = arith.constant 0 : index
      %c0_71 = arith.constant 0 : index
      %133 = vector.load %arg16[%132, %c0_70, %c0_71] : memref<3x128x64xbf16, #tpu.memory_space<vmem>>, vector<1x128x64xbf16>
      %134 = vector.shape_cast %133 : vector<1x128x64xbf16> to vector<128x64xbf16>
      %135 = vector.shape_cast %131 : vector<1x16x128xbf16> to vector<16x128xbf16>
      %cst_72 = arith.constant dense<0.000000e+00> : vector<16x64xf32>
      %136 = tpu.matmul %135, %134, %cst_72 {dimension_numbers = #tpu.dot_dimension_numbers<[1], [0], [0], [1], [0, 0, 1, 1], [], []>} : vector<16x128xbf16>, vector<128x64xbf16>, vector<16x64xf32> -> vector<16x64xf32>
      %137 = vector.shape_cast %136 : vector<16x64xf32> to vector<1x16x64xf32>
      %138 = arith.index_cast %arg22 : i32 to index
      %c0_73 = arith.constant 0 : index
      %c0_74 = arith.constant 0 : index
      %139 = vector.load %arg17[%138, %c0_73, %c0_74] : memref<3x1x64xf32, #tpu.memory_space<vmem>>, vector<1x1x64xf32>
      %140 = vector.shape_cast %139 : vector<1x1x64xf32> to vector<1x64xf32>
      %141 = vector.shape_cast %140 : vector<1x64xf32> to vector<1x1x64xf32>
      %142 = vector.broadcast %141 : vector<1x1x64xf32> to vector<1x16x64xf32>
      %143 = arith.addf %137, %142 : vector<1x16x64xf32>
      %cst_75 = arith.constant 0.000000e+00 : f32
      %144 = vector.broadcast %cst_75 : f32 to vector<1x16x64xf32>
      %145 = arith.maximumf %143, %144 : vector<1x16x64xf32>
      %146 = vector.broadcast %0 : vector<1x16x1xf32> to vector<1x16x64xf32>
      %147 = arith.mulf %145, %146 : vector<1x16x64xf32>
      scf.yield %147, %125 : vector<1x16x64xf32>, vector<1x16x64xf32>
    }
    %c3_i32_31 = arith.constant 3 : i32
    %c0_32 = arith.constant 0 : index
    %c0_33 = arith.constant 0 : index
    %c0_34 = arith.constant 0 : index
    %38 = vector.load %arg9[%c0_32, %c0_33, %c0_34] : memref<1x1x1xf32, #tpu.memory_space<vmem>>, vector<1x1x1xf32>
    %c0_35 = arith.constant 0 : index
    %c0_36 = arith.constant 0 : index
    %39 = vector.load %arg18[%c0_35, %c0_36] : memref<64x64xbf16, #tpu.memory_space<vmem>>, vector<64x64xbf16>
    %40 = vector.broadcast %1 : vector<1x16x1xf32> to vector<1x16x64xf32>
    %41 = arith.mulf %37#1, %40 : vector<1x16x64xf32>
    %cst_37 = arith.constant dense<0.000000e+00> : vector<1x64xf32>
    %42 = vector.multi_reduction <add>, %41, %cst_37 [1] : vector<1x16x64xf32> to vector<1x64xf32>
    %43 = vector.shape_cast %38 : vector<1x1x1xf32> to vector<1x1xf32>
    %44 = vector.broadcast %43 : vector<1x1xf32> to vector<1x64xf32>
    %45 = arith.mulf %42, %44 : vector<1x64xf32>
    %46 = arith.truncf %45 : vector<1x64xf32> to vector<1x64xbf16>
    %cst_38 = arith.constant dense<0.000000e+00> : vector<1x64xf32>
    %47 = tpu.matmul %46, %39, %cst_38 {dimension_numbers = #tpu.dot_dimension_numbers<[1], [0], [0], [1], [0, 0, 1, 1], [], []>} : vector<1x64xbf16>, vector<64x64xbf16>, vector<1x64xf32> -> vector<1x64xf32>
    %48 = math.tanh %47 : vector<1x64xf32>
    %49 = vector.shape_cast %48 : vector<1x64xf32> to vector<1x1x64xf32>
    %50 = vector.broadcast %49 : vector<1x1x64xf32> to vector<1x16x64xf32>
    %51 = arith.mulf %37#1, %50 : vector<1x16x64xf32>
    %cst_39 = arith.constant dense<0.000000e+00> : vector<1x16xf32>
    %52 = vector.multi_reduction <add>, %51, %cst_39 [2] : vector<1x16x64xf32> to vector<1x16xf32>
    %53 = vector.shape_cast %52 : vector<1x16xf32> to vector<1x16x1xf32>
    %cst_40 = arith.constant 0.000000e+00 : f32
    %54 = vector.broadcast %cst_40 : f32 to vector<1x16x1xf32>
    %55 = arith.subf %54, %53 : vector<1x16x1xf32>
    %56 = math.exp %55 : vector<1x16x1xf32>
    %cst_41 = arith.constant 1.000000e+00 : f32
    %57 = vector.broadcast %cst_41 : f32 to vector<1x16x1xf32>
    %58 = arith.addf %57, %56 : vector<1x16x1xf32>
    %cst_42 = arith.constant 1.000000e+00 : f32
    %59 = vector.broadcast %cst_42 : f32 to vector<1x16x1xf32>
    %60 = arith.divf %59, %58 : vector<1x16x1xf32>
    %61 = vector.broadcast %60 : vector<1x16x1xf32> to vector<1x16x64xf32>
    %62 = arith.mulf %61, %37#1 : vector<1x16x64xf32>
    %63 = vector.broadcast %1 : vector<1x16x1xf32> to vector<1x16x64xf32>
    %64 = arith.mulf %62, %63 : vector<1x16x64xf32>
    %cst_43 = arith.constant dense<0.000000e+00> : vector<1x64xf32>
    %65 = vector.multi_reduction <add>, %64, %cst_43 [1] : vector<1x16x64xf32> to vector<1x64xf32>
    %c0_44 = arith.constant 0 : index
    %c0_45 = arith.constant 0 : index
    %c0_46 = arith.constant 0 : index
    %66 = vector.load %arg8[%c0_44, %c0_45, %c0_46] : memref<1x1x1xf32, #tpu.memory_space<vmem>>, vector<1x1x1xf32>
    %c0_47 = arith.constant 0 : index
    %c0_48 = arith.constant 0 : index
    %67 = vector.load %arg19[%c0_47, %c0_48] : memref<64x64xbf16, #tpu.memory_space<vmem>>, vector<64x64xbf16>
    %68 = vector.broadcast %0 : vector<1x16x1xf32> to vector<1x16x64xf32>
    %69 = arith.mulf %37#0, %68 : vector<1x16x64xf32>
    %cst_49 = arith.constant dense<0.000000e+00> : vector<1x64xf32>
    %70 = vector.multi_reduction <add>, %69, %cst_49 [1] : vector<1x16x64xf32> to vector<1x64xf32>
    %71 = vector.shape_cast %66 : vector<1x1x1xf32> to vector<1x1xf32>
    %72 = vector.broadcast %71 : vector<1x1xf32> to vector<1x64xf32>
    %73 = arith.mulf %70, %72 : vector<1x64xf32>
    %74 = arith.truncf %73 : vector<1x64xf32> to vector<1x64xbf16>
    %cst_50 = arith.constant dense<0.000000e+00> : vector<1x64xf32>
    %75 = tpu.matmul %74, %67, %cst_50 {dimension_numbers = #tpu.dot_dimension_numbers<[1], [0], [0], [1], [0, 0, 1, 1], [], []>} : vector<1x64xbf16>, vector<64x64xbf16>, vector<1x64xf32> -> vector<1x64xf32>
    %76 = math.tanh %75 : vector<1x64xf32>
    %77 = vector.shape_cast %76 : vector<1x64xf32> to vector<1x1x64xf32>
    %78 = vector.broadcast %77 : vector<1x1x64xf32> to vector<1x16x64xf32>
    %79 = arith.mulf %37#0, %78 : vector<1x16x64xf32>
    %cst_51 = arith.constant dense<0.000000e+00> : vector<1x16xf32>
    %80 = vector.multi_reduction <add>, %79, %cst_51 [2] : vector<1x16x64xf32> to vector<1x16xf32>
    %81 = vector.shape_cast %80 : vector<1x16xf32> to vector<1x16x1xf32>
    %cst_52 = arith.constant 0.000000e+00 : f32
    %82 = vector.broadcast %cst_52 : f32 to vector<1x16x1xf32>
    %83 = arith.subf %82, %81 : vector<1x16x1xf32>
    %84 = math.exp %83 : vector<1x16x1xf32>
    %cst_53 = arith.constant 1.000000e+00 : f32
    %85 = vector.broadcast %cst_53 : f32 to vector<1x16x1xf32>
    %86 = arith.addf %85, %84 : vector<1x16x1xf32>
    %cst_54 = arith.constant 1.000000e+00 : f32
    %87 = vector.broadcast %cst_54 : f32 to vector<1x16x1xf32>
    %88 = arith.divf %87, %86 : vector<1x16x1xf32>
    %89 = vector.broadcast %88 : vector<1x16x1xf32> to vector<1x16x64xf32>
    %90 = arith.mulf %89, %37#0 : vector<1x16x64xf32>
    %91 = vector.broadcast %0 : vector<1x16x1xf32> to vector<1x16x64xf32>
    %92 = arith.mulf %90, %91 : vector<1x16x64xf32>
    %cst_55 = arith.constant dense<0.000000e+00> : vector<1x64xf32>
    %93 = vector.multi_reduction <add>, %92, %cst_55 [1] : vector<1x16x64xf32> to vector<1x64xf32>
    %94 = vector.shape_cast %65 : vector<1x64xf32> to vector<1x1x64xf32>
    %95 = vector.shape_cast %94 : vector<1x1x64xf32> to vector<1x1x64xf32>
    %96 = vector.broadcast %95 : vector<1x1x64xf32> to vector<1x16x64xf32>
    %97 = tpu.concatenate %37#1, %96 in 2 : vector<1x16x64xf32>, vector<1x16x64xf32> -> vector<1x16x128xf32>
    %c0_56 = arith.constant 0 : index
    %c0_57 = arith.constant 0 : index
    %c0_58 = arith.constant 0 : index
    %98 = vector.load %arg20[%c0_56, %c0_57, %c0_58] : memref<1x16x128xf32, #tpu.memory_space<vmem>>, vector<1x16x128xf32>
    tpu.vector_store %arg20[%c0_56, %c0_57, %c0_58], %97 {strides = array<i32>} : memref<1x16x128xf32, #tpu.memory_space<vmem>>, vector<1x16x128xf32>,
    %99 = vector.shape_cast %93 : vector<1x64xf32> to vector<1x1x64xf32>
    %100 = vector.shape_cast %99 : vector<1x1x64xf32> to vector<1x1x64xf32>
    %101 = vector.broadcast %100 : vector<1x1x64xf32> to vector<1x16x64xf32>
    %102 = tpu.concatenate %37#0, %101 in 2 : vector<1x16x64xf32>, vector<1x16x64xf32> -> vector<1x16x128xf32>
    %c0_59 = arith.constant 0 : index
    %c0_60 = arith.constant 0 : index
    %c0_61 = arith.constant 0 : index
    %103 = vector.load %arg21[%c0_59, %c0_60, %c0_61] : memref<1x16x128xf32, #tpu.memory_space<vmem>>, vector<1x16x128xf32>
    tpu.vector_store %arg21[%c0_59, %c0_60, %c0_61], %102 {strides = array<i32>} : memref<1x16x128xf32, #tpu.memory_space<vmem>>, vector<1x16x128xf32>,
    return
  }
  func.func @transform_0(%arg0: i32) -> (i32, i32, i32) {
    %c0_i32 = arith.constant 0 : i32
    %c0_i32_0 = arith.constant 0 : i32
    %c0_i32_1 = arith.constant 0 : i32
    return %arg0, %c0_i32, %c0_i32_0 : i32, i32, i32
  }
  func.func @transform_1(%arg0: i32) -> (i32, i32, i32) {
    %c0_i32 = arith.constant 0 : i32
    %c0_i32_0 = arith.constant 0 : i32
    %c0_i32_1 = arith.constant 0 : i32
    return %arg0, %c0_i32, %c0_i32_0 : i32, i32, i32
  }
  func.func @transform_2(%arg0: i32) -> (i32, i32, i32) {
    %c0_i32 = arith.constant 0 : i32
    %c0_i32_0 = arith.constant 0 : i32
    %c0_i32_1 = arith.constant 0 : i32
    return %arg0, %c0_i32, %c0_i32_0 : i32, i32, i32
  }
  func.func @transform_3(%arg0: i32) -> (i32, i32, i32) {
    %c0_i32 = arith.constant 0 : i32
    %c0_i32_0 = arith.constant 0 : i32
    %c0_i32_1 = arith.constant 0 : i32
    return %arg0, %c0_i32, %c0_i32_0 : i32, i32, i32
  }
  func.func @transform_4(%arg0: i32) -> (i32, i32, i32) {
    %c0_i32 = arith.constant 0 : i32
    %c0_i32_0 = arith.constant 0 : i32
    %c0_i32_1 = arith.constant 0 : i32
    return %arg0, %c0_i32, %c0_i32_0 : i32, i32, i32
  }
  func.func @transform_5(%arg0: i32) -> (i32, i32, i32) {
    %c0_i32 = arith.constant 0 : i32
    %c0_i32_0 = arith.constant 0 : i32
    %c0_i32_1 = arith.constant 0 : i32
    return %arg0, %c0_i32, %c0_i32_0 : i32, i32, i32
  }
  func.func @transform_6(%arg0: i32) -> (i32, i32, i32) {
    %c0_i32 = arith.constant 0 : i32
    %c0_i32_0 = arith.constant 0 : i32
    %c0_i32_1 = arith.constant 0 : i32
    return %arg0, %c0_i32, %c0_i32_0 : i32, i32, i32
  }
  func.func @transform_7(%arg0: i32) -> (i32, i32, i32) {
    %c0_i32 = arith.constant 0 : i32
    %c0_i32_0 = arith.constant 0 : i32
    %c0_i32_1 = arith.constant 0 : i32
    return %arg0, %c0_i32, %c0_i32_0 : i32, i32, i32
  }
  func.func @transform_8(%arg0: i32) -> (i32, i32, i32) {
    %c0_i32 = arith.constant 0 : i32
    %c0_i32_0 = arith.constant 0 : i32
    %c0_i32_1 = arith.constant 0 : i32
    return %arg0, %c0_i32, %c0_i32_0 : i32, i32, i32
  }
  func.func @transform_9(%arg0: i32) -> (i32, i32) {
    %c0_i32 = arith.constant 0 : i32
    %c0_i32_0 = arith.constant 0 : i32
    %c0_i32_1 = arith.constant 0 : i32
    return %c0_i32, %c0_i32_0 : i32, i32
  }
  func.func @transform_10(%arg0: i32) -> (i32, i32) {
    %c0_i32 = arith.constant 0 : i32
    %c0_i32_0 = arith.constant 0 : i32
    %c0_i32_1 = arith.constant 0 : i32
    return %c0_i32, %c0_i32_0 : i32, i32
  }
  func.func @transform_11(%arg0: i32) -> (i32, i32) {
    %c0_i32 = arith.constant 0 : i32
    %c0_i32_0 = arith.constant 0 : i32
    %c0_i32_1 = arith.constant 0 : i32
    return %c0_i32, %c0_i32_0 : i32, i32
  }
  func.func @transform_12(%arg0: i32) -> (i32, i32) {
    %c0_i32 = arith.constant 0 : i32
    %c0_i32_0 = arith.constant 0 : i32
    %c0_i32_1 = arith.constant 0 : i32
    return %c0_i32, %c0_i32_0 : i32, i32
  }
  func.func @transform_13(%arg0: i32) -> (i32, i32, i32) {
    %c0_i32 = arith.constant 0 : i32
    %c0_i32_0 = arith.constant 0 : i32
    %c0_i32_1 = arith.constant 0 : i32
    %c0_i32_2 = arith.constant 0 : i32
    return %c0_i32, %c0_i32_0, %c0_i32_1 : i32, i32, i32
  }
  func.func @transform_14(%arg0: i32) -> (i32, i32, i32) {
    %c0_i32 = arith.constant 0 : i32
    %c0_i32_0 = arith.constant 0 : i32
    %c0_i32_1 = arith.constant 0 : i32
    %c0_i32_2 = arith.constant 0 : i32
    return %c0_i32, %c0_i32_0, %c0_i32_1 : i32, i32, i32
  }
  func.func @transform_15(%arg0: i32) -> (i32, i32, i32) {
    %c0_i32 = arith.constant 0 : i32
    %c0_i32_0 = arith.constant 0 : i32
    %c0_i32_1 = arith.constant 0 : i32
    %c0_i32_2 = arith.constant 0 : i32
    return %c0_i32, %c0_i32_0, %c0_i32_1 : i32, i32, i32
  }
  func.func @transform_16(%arg0: i32) -> (i32, i32, i32) {
    %c0_i32 = arith.constant 0 : i32
    %c0_i32_0 = arith.constant 0 : i32
    %c0_i32_1 = arith.constant 0 : i32
    %c0_i32_2 = arith.constant 0 : i32
    return %c0_i32, %c0_i32_0, %c0_i32_1 : i32, i32, i32
  }
  func.func @transform_17(%arg0: i32) -> (i32, i32) {
    %c0_i32 = arith.constant 0 : i32
    %c0_i32_0 = arith.constant 0 : i32
    %c0_i32_1 = arith.constant 0 : i32
    return %c0_i32, %c0_i32_0 : i32, i32
  }
  func.func @transform_18(%arg0: i32) -> (i32, i32) {
    %c0_i32 = arith.constant 0 : i32
    %c0_i32_0 = arith.constant 0 : i32
    %c0_i32_1 = arith.constant 0 : i32
    return %c0_i32, %c0_i32_0 : i32, i32
  }
  func.func @transform_19(%arg0: i32) -> (i32, i32, i32) {
    %c0_i32 = arith.constant 0 : i32
    %c0_i32_0 = arith.constant 0 : i32
    %c0_i32_1 = arith.constant 0 : i32
    return %arg0, %c0_i32, %c0_i32_0 : i32, i32, i32
  }
  func.func @transform_20(%arg0: i32) -> (i32, i32, i32) {
    %c0_i32 = arith.constant 0 : i32
    %c0_i32_0 = arith.constant 0 : i32
    %c0_i32_1 = arith.constant 0 : i32
    return %arg0, %c0_i32, %c0_i32_0 : i32, i32, i32
  }
}

</mosaic_0001>

<llo_original>
// kernel: graph_encoder_forward.1
$region0: #{graph_encoder_forward.1}
  #allocation0 [shape = 'u32[]', space=smem, size = 0x4, offset = 0x4, fixed_abs, tag = 'smem constant byte address 0x4 - core index']
  #allocation1 [shape = 'u32[144,128]{1,0:T(1,128)}', space=vmem, size = 0x12000, scoped, tag = 'internal scratch']
  %s0 = inlined_call_operand.vmem [shape: f32[2,16,8], index: 0, kind: input, shape index: {}]
  %s1 = inlined_call_operand.vmem [shape: f32[2,16,8], index: 1, kind: input, shape index: {}]
  %s2 = inlined_call_operand.vmem [shape: bf16[2,16,16], index: 2, kind: input, shape index: {}]
  %s3 = inlined_call_operand.vmem [shape: f32[2,16,1], index: 3, kind: input, shape index: {}]
  %s4 = inlined_call_operand.vmem [shape: f32[2,16,1], index: 4, kind: input, shape index: {}]
  %s5 = inlined_call_operand.vmem [shape: f32[2,16,1], index: 5, kind: input, shape index: {}]
  %s6 = inlined_call_operand.vmem [shape: f32[2,16,1], index: 6, kind: input, shape index: {}]
  %s7 = inlined_call_operand.vmem [shape: f32[2,1,1], index: 7, kind: input, shape index: {}]
  %s8 = inlined_call_operand.vmem [shape: f32[2,1,1], index: 8, kind: input, shape index: {}]
  %s9 = inlined_call_operand.vmem [shape: bf16[8,64], index: 9, kind: input, shape index: {}]
  %s10 = inlined_call_operand.vmem [shape: f32[1,64], index: 10, kind: input, shape index: {}]
  %s11 = inlined_call_operand.vmem [shape: bf16[8,64], index: 11, kind: input, shape index: {}]
  %s12 = inlined_call_operand.vmem [shape: f32[1,64], index: 12, kind: input, shape index: {}]
  %s13 = inlined_call_operand.vmem [shape: bf16[3,128,64], index: 13, kind: input, shape index: {}]
  %s14 = inlined_call_operand.vmem [shape: f32[3,1,64], index: 14, kind: input, shape index: {}]
  %s15 = inlined_call_operand.vmem [shape: bf16[3,128,64], index: 15, kind: input, shape index: {}]
  %s16 = inlined_call_operand.vmem [shape: f32[3,1,64], index: 16, kind: input, shape index: {}]
  %s17 = inlined_call_operand.vmem [shape: bf16[64,64], index: 17, kind: input, shape index: {}]
  %s18 = inlined_call_operand.vmem [shape: bf16[64,64], index: 18, kind: input, shape index: {}]
  %s19 = inlined_call_operand.hbm [shape: f32[2,16,128], index: 19, kind: output, shape index: {0}]
  %s20 = inlined_call_operand.hbm [shape: f32[2,16,128], index: 20, kind: output, shape index: {1}]
  %21 = xla_tuple %s19, %s20
  %s22 = sld [smem:[#allocation0]]
  $region124: #{graph_encoder_forward.1} parent=0
    _
  %s24 = ssub.s32 1, %s22
  %s25 = scalar_select 0, %s24, %s22
  $region1: #{graph_encoder_forward.1} parent=0
    #allocation2 [shape = 'u8[16384]{0}', space=vmem, size = 0x4000, scoped, tag = 'output window, operand 0']
    #allocation3 [shape = 's32[2]{0}', space=sflag, size = 0x8, scoped, tag = 'scoped memory for graph_encoder_forward.1']
    #allocation4 [shape = 'u8[16384]{0}', space=vmem, size = 0x4000, scoped, tag = 'output window, operand 1']
    #allocation5 [shape = 's32[2]{0}', space=sflag, size = 0x8, scoped, tag = 'scoped memory for graph_encoder_forward.1']
    %26 = vsyncpa [#allocation3], 0
    %s27 = scalar_lea.sflag [#allocation3], 1
    %28 = vsyncpa %s27, 0
    %29 = vsyncpa [#allocation5], 0
    %s30 = scalar_lea.sflag [#allocation5], 1
    %31 = vsyncpa %s30, 0
    loop: start=0, step=1, limit=4
    $region2: #{graph_encoder_forward.1} parent=1 // loop_pre_header
      _
    $region3: #{graph_encoder_forward.1} parent=1 // loop_header
      %s33 = sphi 0, %s37
      %p34 = scmp.ge.s32.totalorder %s33, 4
      %s43 = sphi 0, %s45
      %s46 = sphi 0, %s43
      %s47 = sphi 0, %s46
      %s63 = sphi 0, %s47
      %s69 = sphi 0, %s71
      %s72 = sphi 0, %s69
      %s73 = sphi 0, %s72
      %s89 = sphi 0, %s73
      %s95 = sphi 0, %s97
      %s98 = sphi 0, %s95
      %s99 = sphi 0, %s98
      %s115 = sphi 0, %s99
      %s121 = sphi 0, %s123
      %s124 = sphi 0, %s121
      %s125 = sphi 0, %s124
      %s141 = sphi 0, %s125
      %s147 = sphi 0, %s149
      %s150 = sphi 0, %s147
      %s151 = sphi 0, %s150
      %s167 = sphi 0, %s151
      %s173 = sphi 0, %s175
      %s176 = sphi 0, %s173
      %s177 = sphi 0, %s176
      %s193 = sphi 0, %s177
      %s199 = sphi 0, %s201
      %s202 = sphi 0, %s199
      %s203 = sphi 0, %s202
      %s219 = sphi 0, %s203
      %s225 = sphi 0, %s227
      %s228 = sphi 0, %s225
      %s229 = sphi 0, %s228
      %s245 = sphi 0, %s229
      %s251 = sphi 0, %s253
      %s254 = sphi 0, %s251
      %s255 = sphi 0, %s254
      %s271 = sphi 0, %s255
      %s275 = sphi 0, %s275
      %s277 = sphi 0, %s275
      %s278 = sphi 0, %s277
      %s292 = sphi 0, %s278
      %s296 = sphi 0, %s296
      %s298 = sphi 0, %s296
      %s299 = sphi 0, %s298
      %s313 = sphi 0, %s299
      %s317 = sphi 0, %s317
      %s319 = sphi 0, %s317
      %s320 = sphi 0, %s319
      %s334 = sphi 0, %s320
      %s338 = sphi 0, %s338
      %s340 = sphi 0, %s338
      %s341 = sphi 0, %s340
      %s355 = sphi 0, %s341
      %s359 = sphi 0, %s359
      %s361 = sphi 0, %s359
      %s362 = sphi 0, %s361
      %s376 = sphi 0, %s362
      %s380 = sphi 0, %s380
      %s382 = sphi 0, %s380
      %s383 = sphi 0, %s382
      %s397 = sphi 0, %s383
      %s401 = sphi 0, %s401
      %s403 = sphi 0, %s401
      %s404 = sphi 0, %s403
      %s418 = sphi 0, %s404
      %s422 = sphi 0, %s422
      %s424 = sphi 0, %s422
      %s425 = sphi 0, %s424
      %s439 = sphi 0, %s425
      %s443 = sphi 0, %s443
      %s445 = sphi 0, %s443
      %s446 = sphi 0, %s445
      %s460 = sphi 0, %s446
      %s464 = sphi 0, %s464
      %s466 = sphi 0, %s464
      %s467 = sphi 0, %s466
      %s481 = sphi 0, %s467
      %s487 = sphi 0, %s489
      %s490 = sphi 0, %s487
      %s491 = sphi 0, %s490
      %s507 = sphi 0, %s491
      %s513 = sphi 0, %s515
      %s516 = sphi 0, %s513
      %s517 = sphi 0, %s516
      %s533 = sphi 0, %s517
    $region4: #{graph_encoder_forward.1} parent=1 // loop_header_branch
      %36 = sbr.rel (%p34) target = $region8
    $region5: #{graph_encoder_forward.1} parent=1 // loop_body
      %s38 = ssub.s32 %s33, 1
      %s39 = ssub.s32 %s33, 2
      %s40 = sadd.s32 %s33, 1
      %s41 = ssub.s32 %s33, %s40
      %p42 = scmp.eq.s32.totalorder %s41, 0
      %s44 = sadd.s32 %s43, 1
      %s45 = scalar_select %p42, %s43, %s44
      %p48 = pneg %p42
      %p49 = scmp.eq.s32.totalorder %s33, 1
      %p50 = por %p48, %p49
      %p51 = scmp.ne.s32.totalorder %s43, %s46
      %p52 = scmp.eq.s32.totalorder %s33, 0
      %p53 = por %p51, %p52
      %p54 = scmp.ne.s32.totalorder %s43, %s46
      %p55 = scmp.eq.s32.totalorder %s38, 1
      %p56 = por %p54, %p55
      %p57 = scmp.ne.s32.totalorder %s46, %s47
      %p58 = scmp.eq.s32.totalorder %s38, 0
      %p59 = por %p57, %p58
      %p60 = scmp.ne.s32.totalorder %s46, %s47
      %p61 = scmp.eq.s32.totalorder %s39, 1
      %p62 = por %p60, %p61
      %p64 = scmp.ne.s32.totalorder %s47, %s63
      %p65 = scmp.eq.s32.totalorder %s39, 0
      %p66 = por %p64, %p65
      %s67 = ssub.s32 %s33, %s40
      %p68 = scmp.eq.s32.totalorder %s67, 0
      %s70 = sadd.s32 %s69, 1
      %s71 = scalar_select %p68, %s69, %s70
      %p74 = pneg %p68
      %p75 = scmp.eq.s32.totalorder %s33, 1
      %p76 = por %p74, %p75
      %p77 = scmp.ne.s32.totalorder %s69, %s72
      %p78 = scmp.eq.s32.totalorder %s33, 0
      %p79 = por %p77, %p78
      %p80 = scmp.ne.s32.totalorder %s69, %s72
      %p81 = scmp.eq.s32.totalorder %s38, 1
      %p82 = por %p80, %p81
      %p83 = scmp.ne.s32.totalorder %s72, %s73
      %p84 = scmp.eq.s32.totalorder %s38, 0
      %p85 = por %p83, %p84
      %p86 = scmp.ne.s32.totalorder %s72, %s73
      %p87 = scmp.eq.s32.totalorder %s39, 1
      %p88 = por %p86, %p87
      %p90 = scmp.ne.s32.totalorder %s73, %s89
      %p91 = scmp.eq.s32.totalorder %s39, 0
      %p92 = por %p90, %p91
      %s93 = ssub.s32 %s33, %s40
      %p94 = scmp.eq.s32.totalorder %s93, 0
      %s96 = sadd.s32 %s95, 1
      %s97 = scalar_select %p94, %s95, %s96
      %p100 = pneg %p94
      %p101 = scmp.eq.s32.totalorder %s33, 1
      %p102 = por %p100, %p101
      %p103 = scmp.ne.s32.totalorder %s95, %s98
      %p104 = scmp.eq.s32.totalorder %s33, 0
      %p105 = por %p103, %p104
      %p106 = scmp.ne.s32.totalorder %s95, %s98
      %p107 = scmp.eq.s32.totalorder %s38, 1
      %p108 = por %p106, %p107
      %p109 = scmp.ne.s32.totalorder %s98, %s99
      %p110 = scmp.eq.s32.totalorder %s38, 0
      %p111 = por %p109, %p110
      %p112 = scmp.ne.s32.totalorder %s98, %s99
      %p113 = scmp.eq.s32.totalorder %s39, 1
      %p114 = por %p112, %p113
      %p116 = scmp.ne.s32.totalorder %s99, %s115
      %p117 = scmp.eq.s32.totalorder %s39, 0
      %p118 = por %p116, %p117
      %s119 = ssub.s32 %s33, %s40
      %p120 = scmp.eq.s32.totalorder %s119, 0
      %s122 = sadd.s32 %s121, 1
      %s123 = scalar_select %p120, %s121, %s122
      %p126 = pneg %p120
      %p127 = scmp.eq.s32.totalorder %s33, 1
      %p128 = por %p126, %p127
      %p129 = scmp.ne.s32.totalorder %s121, %s124
      %p130 = scmp.eq.s32.totalorder %s33, 0
      %p131 = por %p129, %p130
      %p132 = scmp.ne.s32.totalorder %s121, %s124
      %p133 = scmp.eq.s32.totalorder %s38, 1
      %p134 = por %p132, %p133
      %p135 = scmp.ne.s32.totalorder %s124, %s125
      %p136 = scmp.eq.s32.totalorder %s38, 0
      %p137 = por %p135, %p136
      %p138 = scmp.ne.s32.totalorder %s124, %s125
      %p139 = scmp.eq.s32.totalorder %s39, 1
      %p140 = por %p138, %p139
      %p142 = scmp.ne.s32.totalorder %s125, %s141
      %p143 = scmp.eq.s32.totalorder %s39, 0
      %p144 = por %p142, %p143
      %s145 = ssub.s32 %s33, %s40
      %p146 = scmp.eq.s32.totalorder %s145, 0
      %s148 = sadd.s32 %s147, 1
      %s149 = scalar_select %p146, %s147, %s148
      %p152 = pneg %p146
      %p153 = scmp.eq.s32.totalorder %s33, 1
      %p154 = por %p152, %p153
      %p155 = scmp.ne.s32.totalorder %s147, %s150
      %p156 = scmp.eq.s32.totalorder %s33, 0
      %p157 = por %p155, %p156
      %p158 = scmp.ne.s32.totalorder %s147, %s150
      %p159 = scmp.eq.s32.totalorder %s38, 1
      %p160 = por %p158, %p159
      %p161 = scmp.ne.s32.totalorder %s150, %s151
      %p162 = scmp.eq.s32.totalorder %s38, 0
      %p163 = por %p161, %p162
      %p164 = scmp.ne.s32.totalorder %s150, %s151
      %p165 = scmp.eq.s32.totalorder %s39, 1
      %p166 = por %p164, %p165
      %p168 = scmp.ne.s32.totalorder %s151, %s167
      %p169 = scmp.eq.s32.totalorder %s39, 0
      %p170 = por %p168, %p169
      %s171 = ssub.s32 %s33, %s40
      %p172 = scmp.eq.s32.totalorder %s171, 0
      %s174 = sadd.s32 %s173, 1
      %s175 = scalar_select %p172, %s173, %s174
      %p178 = pneg %p172
      %p179 = scmp.eq.s32.totalorder %s33, 1
      %p180 = por %p178, %p179
      %p181 = scmp.ne.s32.totalorder %s173, %s176
      %p182 = scmp.eq.s32.totalorder %s33, 0
      %p183 = por %p181, %p182
      %p184 = scmp.ne.s32.totalorder %s173, %s176
      %p185 = scmp.eq.s32.totalorder %s38, 1
      %p186 = por %p184, %p185
      %p187 = scmp.ne.s32.totalorder %s176, %s177
      %p188 = scmp.eq.s32.totalorder %s38, 0
      %p189 = por %p187, %p188
      %p190 = scmp.ne.s32.totalorder %s176, %s177
      %p191 = scmp.eq.s32.totalorder %s39, 1
      %p192 = por %p190, %p191
      %p194 = scmp.ne.s32.totalorder %s177, %s193
      %p195 = scmp.eq.s32.totalorder %s39, 0
      %p196 = por %p194, %p195
      %s197 = ssub.s32 %s33, %s40
      %p198 = scmp.eq.s32.totalorder %s197, 0
      %s200 = sadd.s32 %s199, 1
      %s201 = scalar_select %p198, %s199, %s200
      %p204 = pneg %p198
      %p205 = scmp.eq.s32.totalorder %s33, 1
      %p206 = por %p204, %p205
      %p207 = scmp.ne.s32.totalorder %s199, %s202
      %p208 = scmp.eq.s32.totalorder %s33, 0
      %p209 = por %p207, %p208
      %p210 = scmp.ne.s32.totalorder %s199, %s202
      %p211 = scmp.eq.s32.totalorder %s38, 1
      %p212 = por %p210, %p211
      %p213 = scmp.ne.s32.totalorder %s202, %s203
      %p214 = scmp.eq.s32.totalorder %s38, 0
      %p215 = por %p213, %p214
      %p216 = scmp.ne.s32.totalorder %s202, %s203
      %p217 = scmp.eq.s32.totalorder %s39, 1
      %p218 = por %p216, %p217
      %p220 = scmp.ne.s32.totalorder %s203, %s219
      %p221 = scmp.eq.s32.totalorder %s39, 0
      %p222 = por %p220, %p221
      %s223 = ssub.s32 %s33, %s40
      %p224 = scmp.eq.s32.totalorder %s223, 0
      %s226 = sadd.s32 %s225, 1
      %s227 = scalar_select %p224, %s225, %s226
      %p230 = pneg %p224
      %p231 = scmp.eq.s32.totalorder %s33, 1
      %p232 = por %p230, %p231
      %p233 = scmp.ne.s32.totalorder %s225, %s228
      %p234 = scmp.eq.s32.totalorder %s33, 0
      %p235 = por %p233, %p234
      %p236 = scmp.ne.s32.totalorder %s225, %s228
      %p237 = scmp.eq.s32.totalorder %s38, 1
      %p238 = por %p236, %p237
      %p239 = scmp.ne.s32.totalorder %s228, %s229
      %p240 = scmp.eq.s32.totalorder %s38, 0
      %p241 = por %p239, %p240
      %p242 = scmp.ne.s32.totalorder %s228, %s229
      %p243 = scmp.eq.s32.totalorder %s39, 1
      %p244 = por %p242, %p243
      %p246 = scmp.ne.s32.totalorder %s229, %s245
      %p247 = scmp.eq.s32.totalorder %s39, 0
      %p248 = por %p246, %p247
      %s249 = ssub.s32 %s33, %s40
      %p250 = scmp.eq.s32.totalorder %s249, 0
      %s252 = sadd.s32 %s251, 1
      %s253 = scalar_select %p250, %s251, %s252
      %p256 = pneg %p250
      %p257 = scmp.eq.s32.totalorder %s33, 1
      %p258 = por %p256, %p257
      %p259 = scmp.ne.s32.totalorder %s251, %s254
      %p260 = scmp.eq.s32.totalorder %s33, 0
      %p261 = por %p259, %p260
      %p262 = scmp.ne.s32.totalorder %s251, %s254
      %p263 = scmp.eq.s32.totalorder %s38, 1
      %p264 = por %p262, %p263
      %p265 = scmp.ne.s32.totalorder %s254, %s255
      %p266 = scmp.eq.s32.totalorder %s38, 0
      %p267 = por %p265, %p266
      %p268 = scmp.ne.s32.totalorder %s254, %s255
      %p269 = scmp.eq.s32.totalorder %s39, 1
      %p270 = por %p268, %p269
      %p272 = scmp.ne.s32.totalorder %s255, %s271
      %p273 = scmp.eq.s32.totalorder %s39, 0
      %p274 = por %p272, %p273
      %s276 = sadd.s32 %s275, 1
      %p279 = scmp.eq.s32.totalorder %s33, 1
      %p280 = scmp.ne.s32.totalorder %s275, %s277
      %p281 = scmp.eq.s32.totalorder %s33, 0
      %p282 = por %p280, %p281
      %p283 = scmp.ne.s32.totalorder %s275, %s277
      %p284 = scmp.eq.s32.totalorder %s38, 1
      %p285 = por %p283, %p284
      %p286 = scmp.ne.s32.totalorder %s277, %s278
      %p287 = scmp.eq.s32.totalorder %s38, 0
      %p288 = por %p286, %p287
      %p289 = scmp.ne.s32.totalorder %s277, %s278
      %p290 = scmp.eq.s32.totalorder %s39, 1
      %p291 = por %p289, %p290
      %p293 = scmp.ne.s32.totalorder %s278, %s292
      %p294 = scmp.eq.s32.totalorder %s39, 0
      %p295 = por %p293, %p294
      %s297 = sadd.s32 %s296, 1
      %p300 = scmp.eq.s32.totalorder %s33, 1
      %p301 = scmp.ne.s32.totalorder %s296, %s298
      %p302 = scmp.eq.s32.totalorder %s33, 0
      %p303 = por %p301, %p302
      %p304 = scmp.ne.s32.totalorder %s296, %s298
      %p305 = scmp.eq.s32.totalorder %s38, 1
      %p306 = por %p304, %p305
      %p307 = scmp.ne.s32.totalorder %s298, %s299
      %p308 = scmp.eq.s32.totalorder %s38, 0
      %p309 = por %p307, %p308
      %p310 = scmp.ne.s32.totalorder %s298, %s299
      %p311 = scmp.eq.s32.totalorder %s39, 1
      %p312 = por %p310, %p311
      %p314 = scmp.ne.s32.totalorder %s299, %s313
      %p315 = scmp.eq.s32.totalorder %s39, 0
      %p316 = por %p314, %p315
      %s318 = sadd.s32 %s317, 1
      %p321 = scmp.eq.s32.totalorder %s33, 1
      %p322 = scmp.ne.s32.totalorder %s317, %s319
      %p323 = scmp.eq.s32.totalorder %s33, 0
      %p324 = por %p322, %p323
      %p325 = scmp.ne.s32.totalorder %s317, %s319
      %p326 = scmp.eq.s32.totalorder %s38, 1
      %p327 = por %p325, %p326
      %p328 = scmp.ne.s32.totalorder %s319, %s320
      %p329 = scmp.eq.s32.totalorder %s38, 0
      %p330 = por %p328, %p329
      %p331 = scmp.ne.s32.totalorder %s319, %s320
      %p332 = scmp.eq.s32.totalorder %s39, 1
      %p333 = por %p331, %p332
      %p335 = scmp.ne.s32.totalorder %s320, %s334
      %p336 = scmp.eq.s32.totalorder %s39, 0
      %p337 = por %p335, %p336
      %s339 = sadd.s32 %s338, 1
      %p342 = scmp.eq.s32.totalorder %s33, 1
      %p343 = scmp.ne.s32.totalorder %s338, %s340
      %p344 = scmp.eq.s32.totalorder %s33, 0
      %p345 = por %p343, %p344
      %p346 = scmp.ne.s32.totalorder %s338, %s340
      %p347 = scmp.eq.s32.totalorder %s38, 1
      %p348 = por %p346, %p347
      %p349 = scmp.ne.s32.totalorder %s340, %s341
      %p350 = scmp.eq.s32.totalorder %s38, 0
      %p351 = por %p349, %p350
      %p352 = scmp.ne.s32.totalorder %s340, %s341
      %p353 = scmp.eq.s32.totalorder %s39, 1
      %p354 = por %p352, %p353
      %p356 = scmp.ne.s32.totalorder %s341, %s355
      %p357 = scmp.eq.s32.totalorder %s39, 0
      %p358 = por %p356, %p357
      %s360 = sadd.s32 %s359, 1
      %p363 = scmp.eq.s32.totalorder %s33, 1
      %p364 = scmp.ne.s32.totalorder %s359, %s361
      %p365 = scmp.eq.s32.totalorder %s33, 0
      %p366 = por %p364, %p365
      %p367 = scmp.ne.s32.totalorder %s359, %s361
      %p368 = scmp.eq.s32.totalorder %s38, 1
      %p369 = por %p367, %p368
      %p370 = scmp.ne.s32.totalorder %s361, %s362
      %p371 = scmp.eq.s32.totalorder %s38, 0
      %p372 = por %p370, %p371
      %p373 = scmp.ne.s32.totalorder %s361, %s362
      %p374 = scmp.eq.s32.totalorder %s39, 1
      %p375 = por %p373, %p374
      %p377 = scmp.ne.s32.totalorder %s362, %s376
      %p378 = scmp.eq.s32.totalorder %s39, 0
      %p379 = por %p377, %p378
      %s381 = sadd.s32 %s380, 1
      %p384 = scmp.eq.s32.totalorder %s33, 1
      %p385 = scmp.ne.s32.totalorder %s380, %s382
      %p386 = scmp.eq.s32.totalorder %s33, 0
      %p387 = por %p385, %p386
      %p388 = scmp.ne.s32.totalorder %s380, %s382
      %p389 = scmp.eq.s32.totalorder %s38, 1
      %p390 = por %p388, %p389
      %p391 = scmp.ne.s32.totalorder %s382, %s383
      %p392 = scmp.eq.s32.totalorder %s38, 0
      %p393 = por %p391, %p392
      %p394 = scmp.ne.s32.totalorder %s382, %s383
      %p395 = scmp.eq.s32.totalorder %s39, 1
      %p396 = por %p394, %p395
      %p398 = scmp.ne.s32.totalorder %s383, %s397
      %p399 = scmp.eq.s32.totalorder %s39, 0
      %p400 = por %p398, %p399
      %s402 = sadd.s32 %s401, 1
      %p405 = scmp.eq.s32.totalorder %s33, 1
      %p406 = scmp.ne.s32.totalorder %s401, %s403
      %p407 = scmp.eq.s32.totalorder %s33, 0
      %p408 = por %p406, %p407
      %p409 = scmp.ne.s32.totalorder %s401, %s403
      %p410 = scmp.eq.s32.totalorder %s38, 1
      %p411 = por %p409, %p410
      %p412 = scmp.ne.s32.totalorder %s403, %s404
      %p413 = scmp.eq.s32.totalorder %s38, 0
      %p414 = por %p412, %p413
      %p415 = scmp.ne.s32.totalorder %s403, %s404
      %p416 = scmp.eq.s32.totalorder %s39, 1
      %p417 = por %p415, %p416
      %p419 = scmp.ne.s32.totalorder %s404, %s418
      %p420 = scmp.eq.s32.totalorder %s39, 0
      %p421 = por %p419, %p420
      %s423 = sadd.s32 %s422, 1
      %p426 = scmp.eq.s32.totalorder %s33, 1
      %p427 = scmp.ne.s32.totalorder %s422, %s424
      %p428 = scmp.eq.s32.totalorder %s33, 0
      %p429 = por %p427, %p428
      %p430 = scmp.ne.s32.totalorder %s422, %s424
      %p431 = scmp.eq.s32.totalorder %s38, 1
      %p432 = por %p430, %p431
      %p433 = scmp.ne.s32.totalorder %s424, %s425
      %p434 = scmp.eq.s32.totalorder %s38, 0
      %p435 = por %p433, %p434
      %p436 = scmp.ne.s32.totalorder %s424, %s425
      %p437 = scmp.eq.s32.totalorder %s39, 1
      %p438 = por %p436, %p437
      %p440 = scmp.ne.s32.totalorder %s425, %s439
      %p441 = scmp.eq.s32.totalorder %s39, 0
      %p442 = por %p440, %p441
      %s444 = sadd.s32 %s443, 1
      %p447 = scmp.eq.s32.totalorder %s33, 1
      %p448 = scmp.ne.s32.totalorder %s443, %s445
      %p449 = scmp.eq.s32.totalorder %s33, 0
      %p450 = por %p448, %p449
      %p451 = scmp.ne.s32.totalorder %s443, %s445
      %p452 = scmp.eq.s32.totalorder %s38, 1
      %p453 = por %p451, %p452
      %p454 = scmp.ne.s32.totalorder %s445, %s446
      %p455 = scmp.eq.s32.totalorder %s38, 0
      %p456 = por %p454, %p455
      %p457 = scmp.ne.s32.totalorder %s445, %s446
      %p458 = scmp.eq.s32.totalorder %s39, 1
      %p459 = por %p457, %p458
      %p461 = scmp.ne.s32.totalorder %s446, %s460
      %p462 = scmp.eq.s32.totalorder %s39, 0
      %p463 = por %p461, %p462
      %s465 = sadd.s32 %s464, 1
      %p468 = scmp.eq.s32.totalorder %s33, 1
      %p469 = scmp.ne.s32.totalorder %s464, %s466
      %p470 = scmp.eq.s32.totalorder %s33, 0
      %p471 = por %p469, %p470
      %p472 = scmp.ne.s32.totalorder %s464, %s466
      %p473 = scmp.eq.s32.totalorder %s38, 1
      %p474 = por %p472, %p473
      %p475 = scmp.ne.s32.totalorder %s466, %s467
      %p476 = scmp.eq.s32.totalorder %s38, 0
      %p477 = por %p475, %p476
      %p478 = scmp.ne.s32.totalorder %s466, %s467
      %p479 = scmp.eq.s32.totalorder %s39, 1
      %p480 = por %p478, %p479
      %p482 = scmp.ne.s32.totalorder %s467, %s481
      %p483 = scmp.eq.s32.totalorder %s39, 0
      %p484 = por %p482, %p483
      %s485 = ssub.s32 %s33, %s40
      %p486 = scmp.eq.s32.totalorder %s485, 0
      %s488 = sadd.s32 %s487, 1
      %s489 = scalar_select %p486, %s487, %s488
      %p492 = pneg %p486
      %p493 = scmp.eq.s32.totalorder %s33, 1
      %p494 = por %p492, %p493
      %p495 = scmp.ne.s32.totalorder %s487, %s490
      %p496 = scmp.eq.s32.totalorder %s33, 0
      %p497 = por %p495, %p496
      %p498 = scmp.ne.s32.totalorder %s487, %s490
      %p499 = scmp.eq.s32.totalorder %s38, 1
      %p500 = por %p498, %p499
      %p501 = scmp.ne.s32.totalorder %s490, %s491
      %p502 = scmp.eq.s32.totalorder %s38, 0
      %p503 = por %p501, %p502
      %p504 = scmp.ne.s32.totalorder %s490, %s491
      %p505 = scmp.eq.s32.totalorder %s39, 1
      %p506 = por %p504, %p505
      %p508 = scmp.ne.s32.totalorder %s491, %s507
      %p509 = scmp.eq.s32.totalorder %s39, 0
      %p510 = por %p508, %p509
      %s511 = ssub.s32 %s33, %s40
      %p512 = scmp.eq.s32.totalorder %s511, 0
      %s514 = sadd.s32 %s513, 1
      %s515 = scalar_select %p512, %s513, %s514
      %p518 = pneg %p512
      %p519 = scmp.eq.s32.totalorder %s33, 1
      %p520 = por %p518, %p519
      %p521 = scmp.ne.s32.totalorder %s513, %s516
      %p522 = scmp.eq.s32.totalorder %s33, 0
      %p523 = por %p521, %p522
      %p524 = scmp.ne.s32.totalorder %s513, %s516
      %p525 = scmp.eq.s32.totalorder %s38, 1
      %p526 = por %p524, %p525
      %p527 = scmp.ne.s32.totalorder %s516, %s517
      %p528 = scmp.eq.s32.totalorder %s38, 0
      %p529 = por %p527, %p528
      %p530 = scmp.ne.s32.totalorder %s516, %s517
      %p531 = scmp.eq.s32.totalorder %s39, 1
      %p532 = por %p530, %p531
      %p534 = scmp.ne.s32.totalorder %s517, %s533
      %p535 = scmp.eq.s32.totalorder %s39, 0
      %p536 = por %p534, %p535
      %p537 = scmp.le.s32.totalorder 1, %s33
      %p538 = scmp.lt.s32.totalorder %s33, 3
      %p539 = pnand %p537, %p538
      %p540 = pneg %p539
      // Predicated region
      $region9: #{graph_encoder_forward.1} parent=5 // pred_check
        _
      $region10: #{graph_encoder_forward.1} parent=5 // pred_check_branch
        %542 = sbr.rel (%p539) target = $region12
      $region11: #{graph_encoder_forward.1} parent=5 // pred_region
        %s543 = ssub.s32 %s33, 1
        // Predicated region
        $region13: #{graph_encoder_forward.1} parent=11 // pred_check
          %p544 = pneg %p288
        $region14: #{graph_encoder_forward.1} parent=11 // pred_check_branch
          %546 = sbr.rel (%p544) target = $region16
        $region15: #{graph_encoder_forward.1} parent=11 // pred_region
          _
        $region16: #{graph_encoder_forward.1} parent=11 // pred_fallthru
          _
        // Predicated region
        $region17: #{graph_encoder_forward.1} parent=11 // pred_check
          %p547 = pneg %p309
        $region18: #{graph_encoder_forward.1} parent=11 // pred_check_branch
          %549 = sbr.rel (%p547) target = $region20
        $region19: #{graph_encoder_forward.1} parent=11 // pred_region
          _
        $region20: #{graph_encoder_forward.1} parent=11 // pred_fallthru
          _
        // Predicated region
        $region21: #{graph_encoder_forward.1} parent=11 // pred_check
          %p550 = pneg %p330
        $region22: #{graph_encoder_forward.1} parent=11 // pred_check_branch
          %552 = sbr.rel (%p550) target = $region24
        $region23: #{graph_encoder_forward.1} parent=11 // pred_region
          _
        $region24: #{graph_encoder_forward.1} parent=11 // pred_fallthru
          _
        // Predicated region
        $region25: #{graph_encoder_forward.1} parent=11 // pred_check
          %p553 = pneg %p351
        $region26: #{graph_encoder_forward.1} parent=11 // pred_check_branch
          %555 = sbr.rel (%p553) target = $region28
        $region27: #{graph_encoder_forward.1} parent=11 // pred_region
          _
        $region28: #{graph_encoder_forward.1} parent=11 // pred_fallthru
          _
        // Predicated region
        $region29: #{graph_encoder_forward.1} parent=11 // pred_check
          %p556 = pneg %p372
        $region30: #{graph_encoder_forward.1} parent=11 // pred_check_branch
          %558 = sbr.rel (%p556) target = $region32
        $region31: #{graph_encoder_forward.1} parent=11 // pred_region
          _
        $region32: #{graph_encoder_forward.1} parent=11 // pred_fallthru
          _
        // Predicated region
        $region33: #{graph_encoder_forward.1} parent=11 // pred_check
          %p559 = pneg %p393
        $region34: #{graph_encoder_forward.1} parent=11 // pred_check_branch
          %561 = sbr.rel (%p559) target = $region36
        $region35: #{graph_encoder_forward.1} parent=11 // pred_region
          _
        $region36: #{graph_encoder_forward.1} parent=11 // pred_fallthru
          _
        // Predicated region
        $region37: #{graph_encoder_forward.1} parent=11 // pred_check
          %p562 = pneg %p414
        $region38: #{graph_encoder_forward.1} parent=11 // pred_check_branch
          %564 = sbr.rel (%p562) target = $region40
        $region39: #{graph_encoder_forward.1} parent=11 // pred_region
          _
        $region40: #{graph_encoder_forward.1} parent=11 // pred_fallthru
          _
        // Predicated region
        $region41: #{graph_encoder_forward.1} parent=11 // pred_check
          %p565 = pneg %p435
        $region42: #{graph_encoder_forward.1} parent=11 // pred_check_branch
          %567 = sbr.rel (%p565) target = $region44
        $region43: #{graph_encoder_forward.1} parent=11 // pred_region
          _
        $region44: #{graph_encoder_forward.1} parent=11 // pred_fallthru
          _
        // Predicated region
        $region45: #{graph_encoder_forward.1} parent=11 // pred_check
          %p568 = pneg %p456
        $region46: #{graph_encoder_forward.1} parent=11 // pred_check_branch
          %570 = sbr.rel (%p568) target = $region48
        $region47: #{graph_encoder_forward.1} parent=11 // pred_region
          _
        $region48: #{graph_encoder_forward.1} parent=11 // pred_fallthru
          _
        // Predicated region
        $region49: #{graph_encoder_forward.1} parent=11 // pred_check
          %p571 = pneg %p477
        $region50: #{graph_encoder_forward.1} parent=11 // pred_check_branch
          %573 = sbr.rel (%p571) target = $region52
        $region51: #{graph_encoder_forward.1} parent=11 // pred_region
          _
        $region52: #{graph_encoder_forward.1} parent=11 // pred_fallthru
          _
      $region12: #{graph_encoder_forward.1} parent=5 // pred_fallthru
        _
      %p574 = scmp.lt.s32.totalorder %s33, 2
      // Predicated region
      $region53: #{graph_encoder_forward.1} parent=5 // pred_check
        %p575 = pneg %p574
      $region54: #{graph_encoder_forward.1} parent=5 // pred_check_branch
        %577 = sbr.rel (%p575) target = $region56
      $region55: #{graph_encoder_forward.1} parent=5 // pred_region
        // Predicated region
        $region57: #{graph_encoder_forward.1} parent=55 // pred_check
          %p578 = pneg %p53
        $region58: #{graph_encoder_forward.1} parent=55 // pred_check_branch
          %580 = sbr.rel (%p578) target = $region60
        $region59: #{graph_encoder_forward.1} parent=55 // pred_region
          %p581 = scmp.lt.s32.totalorder %s33, 1
          %s582 = scalar_select %p581, %s33, 1
          %s583 = smul.addr %s582, 2
          %s584 = smul.addr %s583, 8
          %s585 = scalar_lea.vmem %s0, %s584
        $region60: #{graph_encoder_forward.1} parent=55 // pred_fallthru
          _
        // Predicated region
        $region61: #{graph_encoder_forward.1} parent=55 // pred_check
          %p586 = pneg %p79
        $region62: #{graph_encoder_forward.1} parent=55 // pred_check_branch
          %588 = sbr.rel (%p586) target = $region64
        $region63: #{graph_encoder_forward.1} parent=55 // pred_region
          %p589 = scmp.lt.s32.totalorder %s33, 1
          %s590 = scalar_select %p589, %s33, 1
          %s591 = smul.addr %s590, 2
          %s592 = smul.addr %s591, 8
          %s593 = scalar_lea.vmem %s1, %s592
        $region64: #{graph_encoder_forward.1} parent=55 // pred_fallthru
          _
        // Predicated region
        $region65: #{graph_encoder_forward.1} parent=55 // pred_check
          %p594 = pneg %p105
        $region66: #{graph_encoder_forward.1} parent=55 // pred_check_branch
          %596 = sbr.rel (%p594) target = $region68
        $region67: #{graph_encoder_forward.1} parent=55 // pred_region
          %p597 = scmp.lt.s32.totalorder %s33, 1
          %s598 = scalar_select %p597, %s33, 1
          %s599 = smul.addr %s598, 2
          %s600 = smul.addr %s599, 4
          %s601 = scalar_lea.vmem %s2, %s600
        $region68: #{graph_encoder_forward.1} parent=55 // pred_fallthru
          _
        // Predicated region
        $region69: #{graph_encoder_forward.1} parent=55 // pred_check
          %p602 = pneg %p131
        $region70: #{graph_encoder_forward.1} parent=55 // pred_check_branch
          %604 = sbr.rel (%p602) target = $region72
        $region71: #{graph_encoder_forward.1} parent=55 // pred_region
          %p605 = scmp.lt.s32.totalorder %s33, 1
          %s606 = scalar_select %p605, %s33, 1
          %s607 = smul.addr %s606, 2
          %s608 = smul.addr %s607, 8
          %s609 = scalar_lea.vmem %s3, %s608
        $region72: #{graph_encoder_forward.1} parent=55 // pred_fallthru
          _
        // Predicated region
        $region73: #{graph_encoder_forward.1} parent=55 // pred_check
          %p610 = pneg %p157
        $region74: #{graph_encoder_forward.1} parent=55 // pred_check_branch
          %612 = sbr.rel (%p610) target = $region76
        $region75: #{graph_encoder_forward.1} parent=55 // pred_region
          %p613 = scmp.lt.s32.totalorder %s33, 1
          %s614 = scalar_select %p613, %s33, 1
          %s615 = smul.addr %s614, 2
          %s616 = smul.addr %s615, 8
          %s617 = scalar_lea.vmem %s4, %s616
        $region76: #{graph_encoder_forward.1} parent=55 // pred_fallthru
          _
        // Predicated region
        $region77: #{graph_encoder_forward.1} parent=55 // pred_check
          %p618 = pneg %p183
        $region78: #{graph_encoder_forward.1} parent=55 // pred_check_branch
          %620 = sbr.rel (%p618) target = $region80
        $region79: #{graph_encoder_forward.1} parent=55 // pred_region
          %p621 = scmp.lt.s32.totalorder %s33, 1
          %s622 = scalar_select %p621, %s33, 1
          %s623 = smul.addr %s622, 2
          %s624 = smul.addr %s623, 8
          %s625 = scalar_lea.vmem %s5, %s624
        $region80: #{graph_encoder_forward.1} parent=55 // pred_fallthru
          _
        // Predicated region
        $region81: #{graph_encoder_forward.1} parent=55 // pred_check
          %p626 = pneg %p209
        $region82: #{graph_encoder_forward.1} parent=55 // pred_check_branch
          %628 = sbr.rel (%p626) target = $region84
        $region83: #{graph_encoder_forward.1} parent=55 // pred_region
          %p629 = scmp.lt.s32.totalorder %s33, 1
          %s630 = scalar_select %p629, %s33, 1
          %s631 = smul.addr %s630, 2
          %s632 = smul.addr %s631, 8
          %s633 = scalar_lea.vmem %s6, %s632
        $region84: #{graph_encoder_forward.1} parent=55 // pred_fallthru
          _
        // Predicated region
        $region85: #{graph_encoder_forward.1} parent=55 // pred_check
          %p634 = pneg %p235
        $region86: #{graph_encoder_forward.1} parent=55 // pred_check_branch
          %636 = sbr.rel (%p634) target = $region88
        $region87: #{graph_encoder_forward.1} parent=55 // pred_region
          %p637 = scmp.lt.s32.totalorder %s33, 1
          %s638 = scalar_select %p637, %s33, 1
          %s639 = scalar_lea.vmem %s7, %s638
        $region88: #{graph_encoder_forward.1} parent=55 // pred_fallthru
          _
        // Predicated region
        $region89: #{graph_encoder_forward.1} parent=55 // pred_check
          %p640 = pneg %p261
        $region90: #{graph_encoder_forward.1} parent=55 // pred_check_branch
          %642 = sbr.rel (%p640) target = $region92
        $region91: #{graph_encoder_forward.1} parent=55 // pred_region
          %p643 = scmp.lt.s32.totalorder %s33, 1
          %s644 = scalar_select %p643, %s33, 1
          %s645 = scalar_lea.vmem %s8, %s644
        $region92: #{graph_encoder_forward.1} parent=55 // pred_fallthru
          _
      $region56: #{graph_encoder_forward.1} parent=5 // pred_fallthru
        _
      %p646 = scmp.le.s32.totalorder 1, %s33
      %p647 = scmp.lt.s32.totalorder %s33, 3
      %p648 = pnand %p646, %p647
      %p649 = pneg %p648
      // Predicated region
      $region93: #{graph_encoder_forward.1} parent=5 // pred_check
        _
      $region94: #{graph_encoder_forward.1} parent=5 // pred_check_branch
        %651 = sbr.rel (%p648) target = $region96
      $region95: #{graph_encoder_forward.1} parent=5 // pred_region
        %s652 = ssub.s32 %s33, 1
        %p653 = scmp.lt.s32.totalorder %s38, 1
        %s654 = scalar_select %p653, %s38, 1
        %s655 = smul.addr %s654, 2
        %s656 = smul.addr %s655, 8
        %s657 = scalar_lea.vmem %s0, %s656
        %p658 = pneg %p59
        %p659 = pneg %p56
        %p660 = scmp.lt.s32.totalorder %s38, 1
        %s661 = scalar_select %p660, %s38, 1
        %s662 = smul.addr %s661, 2
        %s663 = smul.addr %s662, 8
        %s664 = scalar_lea.vmem %s1, %s663
        %p665 = pneg %p85
        %p666 = pneg %p82
        %p667 = scmp.lt.s32.totalorder %s38, 1
        %s668 = scalar_select %p667, %s38, 1
        %s669 = smul.addr %s668, 2
        %s670 = smul.addr %s669, 4
        %s671 = scalar_lea.vmem %s2, %s670
        %p672 = pneg %p111
        %p673 = pneg %p108
        %p674 = scmp.lt.s32.totalorder %s38, 1
        %s675 = scalar_select %p674, %s38, 1
        %s676 = smul.addr %s675, 2
        %s677 = smul.addr %s676, 8
        %s678 = scalar_lea.vmem %s3, %s677
        %p679 = pneg %p137
        %p680 = pneg %p134
        %p681 = scmp.lt.s32.totalorder %s38, 1
        %s682 = scalar_select %p681, %s38, 1
        %s683 = smul.addr %s682, 2
        %s684 = smul.addr %s683, 8
        %s685 = scalar_lea.vmem %s4, %s684
        %p686 = pneg %p163
        %p687 = pneg %p160
        %p688 = scmp.lt.s32.totalorder %s38, 1
        %s689 = scalar_select %p688, %s38, 1
        %s690 = smul.addr %s689, 2
        %s691 = smul.addr %s690, 8
        %s692 = scalar_lea.vmem %s5, %s691
        %p693 = pneg %p189
        %p694 = pneg %p186
        %p695 = scmp.lt.s32.totalorder %s38, 1
        %s696 = scalar_select %p695, %s38, 1
        %s697 = smul.addr %s696, 2
        %s698 = smul.addr %s697, 8
        %s699 = scalar_lea.vmem %s6, %s698
        %p700 = pneg %p215
        %p701 = pneg %p212
        %p702 = scmp.lt.s32.totalorder %s38, 1
        %s703 = scalar_select %p702, %s38, 1
        %s704 = scalar_lea.vmem %s7, %s703
        %p705 = pneg %p241
        %p706 = pneg %p238
        %p707 = scmp.lt.s32.totalorder %s38, 1
        %s708 = scalar_select %p707, %s38, 1
        %s709 = scalar_lea.vmem %s8, %s708
        %p710 = pneg %p267
        %p711 = pneg %p264
        %p712 = pneg %p288
        %p713 = pneg %p285
        %p714 = pneg %p309
        %p715 = pneg %p306
        %p716 = pneg %p330
        %p717 = pneg %p327
        %p718 = pneg %p351
        %p719 = pneg %p348
        %p720 = pneg %p372
        %p721 = pneg %p369
        %p722 = pneg %p393
        %p723 = pneg %p390
        %p724 = pneg %p414
        %p725 = pneg %p411
        %p726 = pneg %p435
        %p727 = pneg %p432
        %p728 = pneg %p456
        %p729 = pneg %p453
        %p730 = pneg %p477
        %p731 = pneg %p474
        %p732 = pneg %p503
        %p733 = pneg %p500
        %s734 = sand.u32 %s490, 1
        %s735 = scalar_lea.sflag [#allocation3], %s734
        %s736 = sand.u32 %s490, 1
        %s737 = smul.addr %s736, 16
        %s738 = scalar_lea.vmem [#allocation2], %s737
        %p739 = pneg %p529
        %p740 = pneg %p526
        %s741 = sand.u32 %s516, 1
        %s742 = scalar_lea.sflag [#allocation5], %s741
        %s743 = sand.u32 %s516, 1
        %s744 = smul.addr %s743, 16
        %s745 = scalar_lea.vmem [#allocation4], %s744
        %p746 = scmp.lt.s32.totalorder %s38, 1
        %s747 = scalar_select %p746, %s38, 1
        %s748 = smul.addr %s747, 2
        %s749 = smul.addr %s748, 8
        %s750 = scalar_lea.vmem %s0, %s749
        %p751 = scmp.lt.s32.totalorder %s38, 1
        %s752 = scalar_select %p751, %s38, 1
        %s753 = smul.addr %s752, 2
        %s754 = smul.addr %s753, 8
        %s755 = scalar_lea.vmem %s1, %s754
        %p756 = scmp.lt.s32.totalorder %s38, 1
        %s757 = scalar_select %p756, %s38, 1
        %s758 = smul.addr %s757, 2
        %s759 = smul.addr %s758, 4
        %s760 = scalar_lea.vmem %s2, %s759
        %p761 = scmp.lt.s32.totalorder %s38, 1
        %s762 = scalar_select %p761, %s38, 1
        %s763 = smul.addr %s762, 2
        %s764 = smul.addr %s763, 8
        %s765 = scalar_lea.vmem %s3, %s764
        %p766 = scmp.lt.s32.totalorder %s38, 1
        %s767 = scalar_select %p766, %s38, 1
        %s768 = smul.addr %s767, 2
        %s769 = smul.addr %s768, 8
        %s770 = scalar_lea.vmem %s4, %s769
        %p771 = scmp.lt.s32.totalorder %s38, 1
        %s772 = scalar_select %p771, %s38, 1
        %s773 = smul.addr %s772, 2
        %s774 = smul.addr %s773, 8
        %s775 = scalar_lea.vmem %s5, %s774
        %p776 = scmp.lt.s32.totalorder %s38, 1
        %s777 = scalar_select %p776, %s38, 1
        %s778 = smul.addr %s777, 2
        %s779 = smul.addr %s778, 8
        %s780 = scalar_lea.vmem %s6, %s779
        %p781 = scmp.lt.s32.totalorder %s38, 1
        %s782 = scalar_select %p781, %s38, 1
        %s783 = scalar_lea.vmem %s7, %s782
        %p784 = scmp.lt.s32.totalorder %s38, 1
        %s785 = scalar_select %p784, %s38, 1
        %s786 = scalar_lea.vmem %s8, %s785
        %v788 = vld [vmem:[%s765] sm:$0xff]
        %v789 = vld [vmem:[%s765 + $0x8] sm:$0xff]
        %v790 = vld [vmem:[%s770] sm:$0xff]
        %v791 = vld [vmem:[%s770 + $0x8] sm:$0xff]
        %v792 = vld [vmem:[%s775] sm:$0xff]
        %v793 = vld [vmem:[%s775 + $0x8] sm:$0xff]
        %v794 = vld [vmem:[%s780] sm:$0xff]
        %v795 = vld [vmem:[%s780 + $0x8] sm:$0xff]
        %v796 = vld [vmem:[%s760] sm:$0xf]
        %v797 = vld [vmem:[%s760 + $0x4] sm:$0xf]
        %v798 = vunpack.c.l.bf16 %v796
        %v799 = vunpack.c.l.bf16 %v797
        %800 = vxpose.xlu0.b32.start [1/16] %v798, 128
        %801 = vxpose.xlu0.b32.cont [2/16] %v799, 128
        %802 = vxpose.xlu0.b32.cont [3/16] 0.0, 128
        %803 = vxpose.xlu0.b32.cont [4/16] 0.0, 128
        %804 = vxpose.xlu0.b32.cont [5/16] 0.0, 128
        %805 = vxpose.xlu0.b32.cont [6/16] 0.0, 128
        %806 = vxpose.xlu0.b32.cont [7/16] 0.0, 128
        %807 = vxpose.xlu0.b32.cont [8/16] 0.0, 128
        %808 = vxpose.xlu0.b32.cont [9/16] 0.0, 128
        %809 = vxpose.xlu0.b32.cont [10/16] 0.0, 128
        %810 = vxpose.xlu0.b32.cont [11/16] 0.0, 128
        %811 = vxpose.xlu0.b32.cont [12/16] 0.0, 128
        %812 = vxpose.xlu0.b32.cont [13/16] 0.0, 128
        %813 = vxpose.xlu0.b32.cont [14/16] 0.0, 128
        %814 = vxpose.xlu0.b32.cont [15/16] 0.0, 128
        %815 = vxpose.xlu0.b32.end [16/16] 0.0, 128
        %v816 = vpop.trf.xlu0
        %v817 = vpop.trf.xlu0
        %v818 = vpop.trf.xlu0
        %v819 = vpop.trf.xlu0
        %v820 = vpop.trf.xlu0
        %v821 = vpop.trf.xlu0
        %v822 = vpop.trf.xlu0
        %v823 = vpop.trf.xlu0
        %v824 = vpop.trf.xlu0
        %v825 = vpop.trf.xlu0
        %v826 = vpop.trf.xlu0
        %v827 = vpop.trf.xlu0
        %v828 = vpop.trf.xlu0
        %v829 = vpop.trf.xlu0
        %v830 = vpop.trf.xlu0
        %v831 = vpop.trf.xlu0
        %v832 = vpack.c.bf16 %v817, %v816
        %v833 = vld [vmem:[%s750] sm:$0xff]
        %v834 = vld [vmem:[%s750 + $0x8] sm:$0xff]
        %v835 = vpack.c.bf16 %v834, %v833
        %v836 = vld [vmem:[%s9] sm:$0xf]
        %vm837 = vcmask 64512
        %v839 = vsel %vm837, %v835, 0
        %vm841 = vcmask 1043456
        %v843 = vsel %vm841, %v836, 0
        %845 = vmatprep.subr.bf16.mxu0 0
        %846 = vmatpush1.bf16.msra.mxu0 0
        %847 = vmatprep.subr.bf16.mxu0 0
        %848 = vmatpush1.bf16.msra.mxu0 0
        %849 = vmatprep.subr.bf16.mxu0 0
        %850 = vmatpush1.bf16.msra.mxu0 0
        %851 = vmatprep.subr.bf16.mxu0 0
        %852 = vmatpush1.bf16.msra.mxu0 0
        %853 = vmatprep.subr.bf16.mxu0 0
        %854 = vmatpush1.bf16.msra.mxu0 0
        %855 = vmatprep.subr.bf16.mxu0 0
        %856 = vmatpush1.bf16.msra.mxu0 0
        %857 = vmatprep.subr.bf16.mxu0 0
        %858 = vmatpush1.bf16.msra.mxu0 0
        %859 = vmatprep.subr.bf16.mxu0 0
        %860 = vmatpush1.bf16.msra.mxu0 %v843
        %861 = vmatprep.subr.bf16.mxu0 0
        %862 = vmatpush2.bf16.msra.mxu0 0
        %863 = vmatprep.subr.bf16.mxu0 0
        %864 = vmatpush2.bf16.msra.mxu0 0
        %865 = vmatprep.subr.bf16.mxu0 0
        %866 = vmatpush2.bf16.msra.mxu0 0
        %867 = vmatprep.subr.bf16.mxu0 0
        %868 = vmatpush2.bf16.msra.mxu0 0
        %869 = vmatprep.subr.bf16.mxu0 0
        %870 = vmatpush2.bf16.msra.mxu0 0
        %871 = vmatprep.subr.bf16.mxu0 0
        %872 = vmatpush2.bf16.msra.mxu0 0
        %873 = vmatprep.subr.bf16.mxu0 0
        %874 = vmatpush2.bf16.msra.mxu0 0
        %875 = vmatprep.subr.bf16.mxu0 0
        %876 = vmatpush2.bf16.msra.mxu0 0
        %877 = vmatprep.mubr.bf16.mxu0 0
        %878 = vmatmul.mubr.bf16.gmra.mxu0 %v839
        %v879 = vpop.f32.mrf.mxu0
        %v880 = vadd.f32 0.0, %v879
        %v881 = vpop.f32.mrf.mxu0
        %v882 = vpop.f32.mrf.mxu0
        %v883 = vadd.f32 0.0, %v882
        %v884 = vpop.f32.mrf.mxu0
        %885 = vdwg.mxu0
        %v886 = vld [vmem:[%s10] sm:$0x1]
        %v888 = vlaneseq
        %v889 = vshrl.u32 %v888, 7
        %v890 = vsub.s32 0, %v889
        %v891 = vrot.slane %v886, %v890
        %v893 = vadd.f32 %v880, %v891
        %v894 = vadd.f32 %v883, %v891
        %v895 = vmax.f32 %v893, 0.0
        %v896 = vmax.f32 %v894, 0.0
        %898 = vset.pattern.permute.xlu0 0
        %899 = vperm.xlu0 %898, %v788
        %v900 = vpop.permute.xlu0 %899
        %903 = vset.pattern.permute.xlu0 0
        %904 = vperm.xlu0 %903, %v789
        %v905 = vpop.permute.xlu0 %904
        %v907 = vmul.f32 %v895, %v900
        %v908 = vmul.f32 %v896, %v905
        %v909 = vld [vmem:[%s755] sm:$0xff]
        %v910 = vld [vmem:[%s755 + $0x8] sm:$0xff]
        %v911 = vpack.c.bf16 %v910, %v909
        %v912 = vld [vmem:[%s11] sm:$0xf]
        %v914 = vsel %vm837, %v911, 0
        %v917 = vsel %vm841, %v912, 0
        %919 = vmatprep.subr.bf16.mxu0 0
        %920 = vmatpush1.bf16.msra.mxu0 0
        %921 = vmatprep.subr.bf16.mxu0 0
        %922 = vmatpush1.bf16.msra.mxu0 0
        %923 = vmatprep.subr.bf16.mxu0 0
        %924 = vmatpush1.bf16.msra.mxu0 0
        %925 = vmatprep.subr.bf16.mxu0 0
        %926 = vmatpush1.bf16.msra.mxu0 0
        %927 = vmatprep.subr.bf16.mxu0 0
        %928 = vmatpush1.bf16.msra.mxu0 0
        %929 = vmatprep.subr.bf16.mxu0 0
        %930 = vmatpush1.bf16.msra.mxu0 0
        %931 = vmatprep.subr.bf16.mxu0 0
        %932 = vmatpush1.bf16.msra.mxu0 0
        %933 = vmatprep.subr.bf16.mxu0 0
        %934 = vmatpush1.bf16.msra.mxu0 %v917
        %935 = vmatprep.subr.bf16.mxu0 0
        %936 = vmatpush2.bf16.msra.mxu0 0
        %937 = vmatprep.subr.bf16.mxu0 0
        %938 = vmatpush2.bf16.msra.mxu0 0
        %939 = vmatprep.subr.bf16.mxu0 0
        %940 = vmatpush2.bf16.msra.mxu0 0
        %941 = vmatprep.subr.bf16.mxu0 0
        %942 = vmatpush2.bf16.msra.mxu0 0
        %943 = vmatprep.subr.bf16.mxu0 0
        %944 = vmatpush2.bf16.msra.mxu0 0
        %945 = vmatprep.subr.bf16.mxu0 0
        %946 = vmatpush2.bf16.msra.mxu0 0
        %947 = vmatprep.subr.bf16.mxu0 0
        %948 = vmatpush2.bf16.msra.mxu0 0
        %949 = vmatprep.subr.bf16.mxu0 0
        %950 = vmatpush2.bf16.msra.mxu0 0
        %951 = vmatprep.mubr.bf16.mxu0 0
        %952 = vmatmul.mubr.bf16.gmra.mxu0 %v914
        %v953 = vpop.f32.mrf.mxu0
        %v954 = vadd.f32 0.0, %v953
        %v955 = vpop.f32.mrf.mxu0
        %v956 = vpop.f32.mrf.mxu0
        %v957 = vadd.f32 0.0, %v956
        %v958 = vpop.f32.mrf.mxu0
        %959 = vdwg.mxu0
        %v960 = vld [vmem:[%s12] sm:$0x1]
        %v962 = vlaneseq
        %v963 = vshrl.u32 %v962, 7
        %v964 = vsub.s32 0, %v963
        %v965 = vrot.slane %v960, %v964
        %v967 = vadd.f32 %v954, %v965
        %v968 = vadd.f32 %v957, %v965
        %v969 = vmax.f32 %v967, 0.0
        %v970 = vmax.f32 %v968, 0.0
        %972 = vset.pattern.permute.xlu0 0
        %973 = vperm.xlu0 %972, %v790
        %v974 = vpop.permute.xlu0 %973
        %977 = vset.pattern.permute.xlu0 0
        %978 = vperm.xlu0 %977, %v791
        %v979 = vpop.permute.xlu0 %978
        %v981 = vmul.f32 %v969, %v974
        %v982 = vmul.f32 %v970, %v979
        loop: start=0, step=1, limit=3
        $region97: #{graph_encoder_forward.1} parent=95 // loop_pre_header
          _
        $region98: #{graph_encoder_forward.1} parent=95 // loop_header
          %s984 = sphi 0, %s988
          %p985 = scmp.ge.s32.totalorder %s984, 3
          %v989 = vphi %v907, %v1377
          %v990 = vphi %v908, %v1378
          %v991 = vphi %v981, %v1183
          %v992 = vphi %v982, %v1184
        $region99: #{graph_encoder_forward.1} parent=95 // loop_header_branch
          %987 = sbr.rel (%p985) target = $region103
        $region100: #{graph_encoder_forward.1} parent=95 // loop_body
          %v993 = vpack.c.bf16 %v990, %v989
          %vm994 = vcmask 130048
          %v996 = vsel %vm994, %v832, 0
          %998 = vmatprep.subr.bf16.mxu0 0
          %999 = vmatpush1.bf16.msra.mxu0 0
          %1000 = vmatprep.subr.bf16.mxu0 0
          %1001 = vmatpush1.bf16.msra.mxu0 0
          %1002 = vmatprep.subr.bf16.mxu0 0
          %1003 = vmatpush1.bf16.msra.mxu0 0
          %1004 = vmatprep.subr.bf16.mxu0 0
          %1005 = vmatpush1.bf16.msra.mxu0 0
          %1006 = vmatprep.subr.bf16.mxu0 0
          %1007 = vmatpush1.bf16.msra.mxu0 0
          %1008 = vmatprep.subr.bf16.mxu0 0
          %1009 = vmatpush1.bf16.msra.mxu0 0
          %1010 = vmatprep.subr.bf16.mxu0 0
          %1011 = vmatpush1.bf16.msra.mxu0 0
          %1012 = vmatprep.subr.bf16.mxu0 0
          %1013 = vmatpush1.bf16.msra.mxu0 %v993
          %1014 = vmatprep.subr.bf16.mxu0 0
          %1015 = vmatpush2.bf16.msra.mxu0 0
          %1016 = vmatprep.subr.bf16.mxu0 0
          %1017 = vmatpush2.bf16.msra.mxu0 0
          %1018 = vmatprep.subr.bf16.mxu0 0
          %1019 = vmatpush2.bf16.msra.mxu0 0
          %1020 = vmatprep.subr.bf16.mxu0 0
          %1021 = vmatpush2.bf16.msra.mxu0 0
          %1022 = vmatprep.subr.bf16.mxu0 0
          %1023 = vmatpush2.bf16.msra.mxu0 0
          %1024 = vmatprep.subr.bf16.mxu0 0
          %1025 = vmatpush2.bf16.msra.mxu0 0
          %1026 = vmatprep.subr.bf16.mxu0 0
          %1027 = vmatpush2.bf16.msra.mxu0 0
          %1028 = vmatprep.subr.bf16.mxu0 0
          %1029 = vmatpush2.bf16.msra.mxu0 0
          %1030 = vmatprep.mubr.bf16.mxu0 0
          %1031 = vmatmul.mubr.bf16.gmra.mxu0 %v996
          %v1032 = vpop.f32.mrf.mxu0
          %v1033 = vadd.f32 0.0, %v1032
          %v1034 = vpop.f32.mrf.mxu0
          %v1035 = vpop.f32.mrf.mxu0
          %v1036 = vadd.f32 0.0, %v1035
          %v1037 = vpop.f32.mrf.mxu0
          %1038 = vdwg.mxu0
          %1040 = vset.pattern.permute.xlu0 0
          %1041 = vperm.xlu0 %1040, %v794
          %v1042 = vpop.permute.xlu0 %1041
          %1045 = vset.pattern.permute.xlu0 0
          %1046 = vperm.xlu0 %1045, %v795
          %v1047 = vpop.permute.xlu0 %1046
          %v1049 = vmul.f32 %v1033, %v1042
          %v1050 = vmul.f32 %v1036, %v1047
          %1053 = vrot.lane.b32.xlu0 %v991, 64
          %v1054 = vpop.permute.xlu0 %1053
          %1055 = vrot.lane.b32.xlu0 %v992, 64
          %v1056 = vpop.permute.xlu0 %1055
          %vm1059 = vcmask 523264
          %v1060 = vsel %vm1059, %v1049, %v1054
          %v1061 = vsel %vm1059, %v1050, %v1056
          %v1062 = vpack.c.bf16 %v1061, %v1060
          %s1063 = smul.u32 %s984, 16
          %s1064 = smul.addr %s1063, 4
          %s1065 = scalar_lea.vmem %s13, %s1064
          %v1066 = vld [vmem:[%s1065] sm:$0xf]
          %v1067 = vld [vmem:[%s1065 + $0x4] sm:$0xf]
          %v1068 = vld [vmem:[%s1065 + $0x8] sm:$0xf]
          %v1069 = vld [vmem:[%s1065 + $0xc] sm:$0xf]
          %v1070 = vld [vmem:[%s1065 + $0x10] sm:$0xf]
          %v1071 = vld [vmem:[%s1065 + $0x14] sm:$0xf]
          %v1072 = vld [vmem:[%s1065 + $0x18] sm:$0xf]
          %v1073 = vld [vmem:[%s1065 + $0x1c] sm:$0xf]
          %v1074 = vld [vmem:[%s1065 + $0x20] sm:$0xf]
          %v1075 = vld [vmem:[%s1065 + $0x24] sm:$0xf]
          %v1076 = vld [vmem:[%s1065 + $0x28] sm:$0xf]
          %v1077 = vld [vmem:[%s1065 + $0x2c] sm:$0xf]
          %v1078 = vld [vmem:[%s1065 + $0x30] sm:$0xf]
          %v1079 = vld [vmem:[%s1065 + $0x34] sm:$0xf]
          %v1080 = vld [vmem:[%s1065 + $0x38] sm:$0xf]
          %v1081 = vld [vmem:[%s1065 + $0x3c] sm:$0xf]
          %v1098 = vunpack.c.l.b16 %v1066
          %v1099 = vunpack.c.l.b16 %v1067
          %v1100 = vunpack.c.l.b16 %v1068
          %v1101 = vunpack.c.l.b16 %v1069
          %v1102 = vunpack.c.l.b16 %v1070
          %v1103 = vunpack.c.l.b16 %v1071
          %v1104 = vunpack.c.l.b16 %v1072
          %v1105 = vunpack.c.l.b16 %v1073
          %v1106 = vunpack.c.l.b16 %v1074
          %v1107 = vunpack.c.l.b16 %v1075
          %v1108 = vunpack.c.l.b16 %v1076
          %v1109 = vunpack.c.l.b16 %v1077
          %v1110 = vunpack.c.l.b16 %v1078
          %v1111 = vunpack.c.l.b16 %v1079
          %v1112 = vunpack.c.l.b16 %v1080
          %v1113 = vunpack.c.l.b16 %v1081
          %v1114 = vpack.c.b16 %v1099, %v1098
          %v1115 = vpack.c.b16 %v1101, %v1100
          %v1116 = vpack.c.b16 %v1103, %v1102
          %v1117 = vpack.c.b16 %v1105, %v1104
          %v1118 = vpack.c.b16 %v1107, %v1106
          %v1119 = vpack.c.b16 %v1109, %v1108
          %v1120 = vpack.c.b16 %v1111, %v1110
          %v1121 = vpack.c.b16 %v1113, %v1112
          %1130 = vmatprep.subr.bf16.mxu0 0
          %1131 = vmatpush1.bf16.msra.mxu0 %v1121
          %1132 = vmatprep.subr.bf16.mxu0 0
          %1133 = vmatpush1.bf16.msra.mxu0 %v1120
          %1134 = vmatprep.subr.bf16.mxu0 0
          %1135 = vmatpush1.bf16.msra.mxu0 %v1119
          %1136 = vmatprep.subr.bf16.mxu0 0
          %1137 = vmatpush1.bf16.msra.mxu0 %v1118
          %1138 = vmatprep.subr.bf16.mxu0 0
          %1139 = vmatpush1.bf16.msra.mxu0 %v1117
          %1140 = vmatprep.subr.bf16.mxu0 0
          %1141 = vmatpush1.bf16.msra.mxu0 %v1116
          %1142 = vmatprep.subr.bf16.mxu0 0
          %1143 = vmatpush1.bf16.msra.mxu0 %v1115
          %1144 = vmatprep.subr.bf16.mxu0 0
          %1145 = vmatpush1.bf16.msra.mxu0 %v1114
          %1146 = vmatprep.subr.bf16.mxu0 0
          %1147 = vmatpush2.bf16.msra.mxu0 0
          %1148 = vmatprep.subr.bf16.mxu0 0
          %1149 = vmatpush2.bf16.msra.mxu0 0
          %1150 = vmatprep.subr.bf16.mxu0 0
          %1151 = vmatpush2.bf16.msra.mxu0 0
          %1152 = vmatprep.subr.bf16.mxu0 0
          %1153 = vmatpush2.bf16.msra.mxu0 0
          %1154 = vmatprep.subr.bf16.mxu0 0
          %1155 = vmatpush2.bf16.msra.mxu0 0
          %1156 = vmatprep.subr.bf16.mxu0 0
          %1157 = vmatpush2.bf16.msra.mxu0 0
          %1158 = vmatprep.subr.bf16.mxu0 0
          %1159 = vmatpush2.bf16.msra.mxu0 0
          %1160 = vmatprep.subr.bf16.mxu0 0
          %1161 = vmatpush2.bf16.msra.mxu0 0
          %1162 = vmatprep.mubr.bf16.mxu0 0
          %1163 = vmatmul.mubr.bf16.gmra.mxu0 %v1062
          %v1164 = vpop.f32.mrf.mxu0
          %v1165 = vadd.f32 0.0, %v1164
          %v1166 = vpop.f32.mrf.mxu0
          %v1167 = vpop.f32.mrf.mxu0
          %v1168 = vadd.f32 0.0, %v1167
          %v1169 = vpop.f32.mrf.mxu0
          %1170 = vdwg.mxu0
          %s1171 = scalar_lea.vmem %s14, %s984
          %v1172 = vld [vmem:[%s1171] sm:$0x1]
          %v1174 = vlaneseq
          %v1175 = vshrl.u32 %v1174, 7
          %v1176 = vsub.s32 0, %v1175
          %v1177 = vrot.slane %v1172, %v1176
          %v1179 = vadd.f32 %v1165, %v1177
          %v1180 = vadd.f32 %v1168, %v1177
          %v1181 = vmax.f32 %v1179, 0.0
          %v1182 = vmax.f32 %v1180, 0.0
          %v1183 = vmul.f32 %v1181, %v974
          %v1184 = vmul.f32 %v1182, %v979
          %v1185 = vpack.c.bf16 %v1184, %v1183
          %v1188 = vunpack.c.l.b16 %v796
          %v1189 = vunpack.c.l.b16 %v797
          %v1190 = vpack.c.b16 %v1189, %v1188
          %v1192 = vsel %vm994, %v1190, 0
          %1194 = vmatprep.subr.bf16.mxu0 0
          %1195 = vmatpush1.bf16.msra.mxu0 0
          %1196 = vmatprep.subr.bf16.mxu0 0
          %1197 = vmatpush1.bf16.msra.mxu0 0
          %1198 = vmatprep.subr.bf16.mxu0 0
          %1199 = vmatpush1.bf16.msra.mxu0 0
          %1200 = vmatprep.subr.bf16.mxu0 0
          %1201 = vmatpush1.bf16.msra.mxu0 0
          %1202 = vmatprep.subr.bf16.mxu0 0
          %1203 = vmatpush1.bf16.msra.mxu0 0
          %1204 = vmatprep.subr.bf16.mxu0 0
          %1205 = vmatpush1.bf16.msra.mxu0 0
          %1206 = vmatprep.subr.bf16.mxu0 0
          %1207 = vmatpush1.bf16.msra.mxu0 0
          %1208 = vmatprep.subr.bf16.mxu0 0
          %1209 = vmatpush1.bf16.msra.mxu0 %v1185
          %1210 = vmatprep.subr.bf16.mxu0 0
          %1211 = vmatpush2.bf16.msra.mxu0 0
          %1212 = vmatprep.subr.bf16.mxu0 0
          %1213 = vmatpush2.bf16.msra.mxu0 0
          %1214 = vmatprep.subr.bf16.mxu0 0
          %1215 = vmatpush2.bf16.msra.mxu0 0
          %1216 = vmatprep.subr.bf16.mxu0 0
          %1217 = vmatpush2.bf16.msra.mxu0 0
          %1218 = vmatprep.subr.bf16.mxu0 0
          %1219 = vmatpush2.bf16.msra.mxu0 0
          %1220 = vmatprep.subr.bf16.mxu0 0
          %1221 = vmatpush2.bf16.msra.mxu0 0
          %1222 = vmatprep.subr.bf16.mxu0 0
          %1223 = vmatpush2.bf16.msra.mxu0 0
          %1224 = vmatprep.subr.bf16.mxu0 0
          %1225 = vmatpush2.bf16.msra.mxu0 0
          %1226 = vmatprep.mubr.bf16.mxu0 0
          %1227 = vmatmul.mubr.bf16.gmra.mxu0 %v1192
          %v1228 = vpop.f32.mrf.mxu0
          %v1229 = vadd.f32 0.0, %v1228
          %v1230 = vpop.f32.mrf.mxu0
          %v1231 = vpop.f32.mrf.mxu0
          %v1232 = vadd.f32 0.0, %v1231
          %v1233 = vpop.f32.mrf.mxu0
          %1234 = vdwg.mxu0
          %1236 = vset.pattern.permute.xlu0 0
          %1237 = vperm.xlu0 %1236, %v792
          %v1238 = vpop.permute.xlu0 %1237
          %1241 = vset.pattern.permute.xlu0 0
          %1242 = vperm.xlu0 %1241, %v793
          %v1243 = vpop.permute.xlu0 %1242
          %v1245 = vmul.f32 %v1229, %v1238
          %v1246 = vmul.f32 %v1232, %v1243
          %1249 = vrot.lane.b32.xlu0 %v989, 64
          %v1250 = vpop.permute.xlu0 %1249
          %1251 = vrot.lane.b32.xlu0 %v990, 64
          %v1252 = vpop.permute.xlu0 %1251
          %v1255 = vsel %vm1059, %v1245, %v1250
          %v1256 = vsel %vm1059, %v1246, %v1252
          %v1257 = vpack.c.bf16 %v1256, %v1255
          %s1258 = smul.addr %s1063, 4
          %s1259 = scalar_lea.vmem %s15, %s1258
          %v1260 = vld [vmem:[%s1259] sm:$0xf]
          %v1261 = vld [vmem:[%s1259 + $0x4] sm:$0xf]
          %v1262 = vld [vmem:[%s1259 + $0x8] sm:$0xf]
          %v1263 = vld [vmem:[%s1259 + $0xc] sm:$0xf]
          %v1264 = vld [vmem:[%s1259 + $0x10] sm:$0xf]
          %v1265 = vld [vmem:[%s1259 + $0x14] sm:$0xf]
          %v1266 = vld [vmem:[%s1259 + $0x18] sm:$0xf]
          %v1267 = vld [vmem:[%s1259 + $0x1c] sm:$0xf]
          %v1268 = vld [vmem:[%s1259 + $0x20] sm:$0xf]
          %v1269 = vld [vmem:[%s1259 + $0x24] sm:$0xf]
          %v1270 = vld [vmem:[%s1259 + $0x28] sm:$0xf]
          %v1271 = vld [vmem:[%s1259 + $0x2c] sm:$0xf]
          %v1272 = vld [vmem:[%s1259 + $0x30] sm:$0xf]
          %v1273 = vld [vmem:[%s1259 + $0x34] sm:$0xf]
          %v1274 = vld [vmem:[%s1259 + $0x38] sm:$0xf]
          %v1275 = vld [vmem:[%s1259 + $0x3c] sm:$0xf]
          %v1292 = vunpack.c.l.b16 %v1260
          %v1293 = vunpack.c.l.b16 %v1261
          %v1294 = vunpack.c.l.b16 %v1262
          %v1295 = vunpack.c.l.b16 %v1263
          %v1296 = vunpack.c.l.b16 %v1264
          %v1297 = vunpack.c.l.b16 %v1265
          %v1298 = vunpack.c.l.b16 %v1266
          %v1299 = vunpack.c.l.b16 %v1267
          %v1300 = vunpack.c.l.b16 %v1268
          %v1301 = vunpack.c.l.b16 %v1269
          %v1302 = vunpack.c.l.b16 %v1270
          %v1303 = vunpack.c.l.b16 %v1271
          %v1304 = vunpack.c.l.b16 %v1272
          %v1305 = vunpack.c.l.b16 %v1273
          %v1306 = vunpack.c.l.b16 %v1274
          %v1307 = vunpack.c.l.b16 %v1275
          %v1308 = vpack.c.b16 %v1293, %v1292
          %v1309 = vpack.c.b16 %v1295, %v1294
          %v1310 = vpack.c.b16 %v1297, %v1296
          %v1311 = vpack.c.b16 %v1299, %v1298
          %v1312 = vpack.c.b16 %v1301, %v1300
          %v1313 = vpack.c.b16 %v1303, %v1302
          %v1314 = vpack.c.b16 %v1305, %v1304
          %v1315 = vpack.c.b16 %v1307, %v1306
          %1324 = vmatprep.subr.bf16.mxu0 0
          %1325 = vmatpush1.bf16.msra.mxu0 %v1315
          %1326 = vmatprep.subr.bf16.mxu0 0
          %1327 = vmatpush1.bf16.msra.mxu0 %v1314
          %1328 = vmatprep.subr.bf16.mxu0 0
          %1329 = vmatpush1.bf16.msra.mxu0 %v1313
          %1330 = vmatprep.subr.bf16.mxu0 0
          %1331 = vmatpush1.bf16.msra.mxu0 %v1312
          %1332 = vmatprep.subr.bf16.mxu0 0
          %1333 = vmatpush1.bf16.msra.mxu0 %v1311
          %1334 = vmatprep.subr.bf16.mxu0 0
          %1335 = vmatpush1.bf16.msra.mxu0 %v1310
          %1336 = vmatprep.subr.bf16.mxu0 0
          %1337 = vmatpush1.bf16.msra.mxu0 %v1309
          %1338 = vmatprep.subr.bf16.mxu0 0
          %1339 = vmatpush1.bf16.msra.mxu0 %v1308
          %1340 = vmatprep.subr.bf16.mxu0 0
          %1341 = vmatpush2.bf16.msra.mxu0 0
          %1342 = vmatprep.subr.bf16.mxu0 0
          %1343 = vmatpush2.bf16.msra.mxu0 0
          %1344 = vmatprep.subr.bf16.mxu0 0
          %1345 = vmatpush2.bf16.msra.mxu0 0
          %1346 = vmatprep.subr.bf16.mxu0 0
          %1347 = vmatpush2.bf16.msra.mxu0 0
          %1348 = vmatprep.subr.bf16.mxu0 0
          %1349 = vmatpush2.bf16.msra.mxu0 0
          %1350 = vmatprep.subr.bf16.mxu0 0
          %1351 = vmatpush2.bf16.msra.mxu0 0
          %1352 = vmatprep.subr.bf16.mxu0 0
          %1353 = vmatpush2.bf16.msra.mxu0 0
          %1354 = vmatprep.subr.bf16.mxu0 0
          %1355 = vmatpush2.bf16.msra.mxu0 0
          %1356 = vmatprep.mubr.bf16.mxu0 0
          %1357 = vmatmul.mubr.bf16.gmra.mxu0 %v1257
          %v1358 = vpop.f32.mrf.mxu0
          %v1359 = vadd.f32 0.0, %v1358
          %v1360 = vpop.f32.mrf.mxu0
          %v1361 = vpop.f32.mrf.mxu0
          %v1362 = vadd.f32 0.0, %v1361
          %v1363 = vpop.f32.mrf.mxu0
          %1364 = vdwg.mxu0
          %s1365 = scalar_lea.vmem %s16, %s984
          %v1366 = vld [vmem:[%s1365] sm:$0x1]
          %v1368 = vlaneseq
          %v1369 = vshrl.u32 %v1368, 7
          %v1370 = vsub.s32 0, %v1369
          %v1371 = vrot.slane %v1366, %v1370
          %v1373 = vadd.f32 %v1359, %v1371
          %v1374 = vadd.f32 %v1362, %v1371
          %v1375 = vmax.f32 %v1373, 0.0
          %v1376 = vmax.f32 %v1374, 0.0
          %v1377 = vmul.f32 %v1375, %v900
          %v1378 = vmul.f32 %v1376, %v905
        $region101: #{graph_encoder_forward.1} parent=95 // loop_footer
          %s988 = sadd.s32 1, %s984
        $region102: #{graph_encoder_forward.1} parent=95 // loop_footer_branch
          %983 = sbr.rel target = $region98
        $region103: #{graph_encoder_forward.1} parent=95 // loop_exit
          _
        %v1379 = vld [vmem:[%s786] sm:$0x1]
        %v1380 = vld [vmem:[%s17] sm:$0xf]
        %v1381 = vld [vmem:[%s17 + $0x4] sm:$0xf]
        %v1382 = vld [vmem:[%s17 + $0x8] sm:$0xf]
        %v1383 = vld [vmem:[%s17 + $0xc] sm:$0xf]
        %v1384 = vld [vmem:[%s17 + $0x10] sm:$0xf]
        %v1385 = vld [vmem:[%s17 + $0x14] sm:$0xf]
        %v1386 = vld [vmem:[%s17 + $0x18] sm:$0xf]
        %v1387 = vld [vmem:[%s17 + $0x1c] sm:$0xf]
        %v1388 = vmul.f32 %v991, %v974
        %v1389 = vmul.f32 %v992, %v979
        %vm1390 = vcmask 523264
        %v1391 = vsel %vm1390, %v1388, 0.0
        %v1392 = vsel %vm1390, %v1389, 0.0
        %v1393 = vadd.f32 %v1391, %v1392
        %v1394 = vrot.slane %v1393, 4
        %v1395 = vadd.f32 %v1393, %v1394
        %v1396 = vrot.slane %v1395, 2
        %v1397 = vadd.f32 %v1395, %v1396
        %v1398 = vrot.slane %v1397, 1
        %v1399 = vadd.f32 %v1397, %v1398
        %1401 = vset.pattern.permute.xlu0 0
        %1402 = vperm.xlu0 %1401, %v1379
        %v1403 = vpop.permute.xlu0 %1402
        %v1405 = vlaneseq
        %v1406 = vshrl.u32 %v1405, 7
        %v1407 = vsub.s32 0, %v1406
        %v1408 = vrot.slane %v1403, %v1407
        %v1409 = vmul.f32 %v1399, %v1408
        %v1410 = vpack.c.bf16 %v1409, %v1409
        %v1419 = vunpack.c.l.b16 %v1380
        %v1420 = vunpack.c.l.b16 %v1381
        %v1421 = vunpack.c.l.b16 %v1382
        %v1422 = vunpack.c.l.b16 %v1383
        %v1423 = vunpack.c.l.b16 %v1384
        %v1424 = vunpack.c.l.b16 %v1385
        %v1425 = vunpack.c.l.b16 %v1386
        %v1426 = vunpack.c.l.b16 %v1387
        %v1427 = vpack.c.b16 %v1420, %v1419
        %v1428 = vpack.c.b16 %v1422, %v1421
        %v1429 = vpack.c.b16 %v1424, %v1423
        %v1430 = vpack.c.b16 %v1426, %v1425
        %v1436 = vsel %vm1390, %v1410, 0
        %1438 = vmatprep.subr.bf16.mxu0 0
        %1439 = vmatpush1.bf16.msra.mxu0 0
        %1440 = vmatprep.subr.bf16.mxu0 0
        %1441 = vmatpush1.bf16.msra.mxu0 0
        %1442 = vmatprep.subr.bf16.mxu0 0
        %1443 = vmatpush1.bf16.msra.mxu0 0
        %1444 = vmatprep.subr.bf16.mxu0 0
        %1445 = vmatpush1.bf16.msra.mxu0 0
        %1446 = vmatprep.subr.bf16.mxu0 0
        %1447 = vmatpush1.bf16.msra.mxu0 %v1430
        %1448 = vmatprep.subr.bf16.mxu0 0
        %1449 = vmatpush1.bf16.msra.mxu0 %v1429
        %1450 = vmatprep.subr.bf16.mxu0 0
        %1451 = vmatpush1.bf16.msra.mxu0 %v1428
        %1452 = vmatprep.subr.bf16.mxu0 0
        %1453 = vmatpush1.bf16.msra.mxu0 %v1427
        %1454 = vmatprep.subr.bf16.mxu0 0
        %1455 = vmatpush2.bf16.msra.mxu0 0
        %1456 = vmatprep.subr.bf16.mxu0 0
        %1457 = vmatpush2.bf16.msra.mxu0 0
        %1458 = vmatprep.subr.bf16.mxu0 0
        %1459 = vmatpush2.bf16.msra.mxu0 0
        %1460 = vmatprep.subr.bf16.mxu0 0
        %1461 = vmatpush2.bf16.msra.mxu0 0
        %1462 = vmatprep.subr.bf16.mxu0 0
        %1463 = vmatpush2.bf16.msra.mxu0 0
        %1464 = vmatprep.subr.bf16.mxu0 0
        %1465 = vmatpush2.bf16.msra.mxu0 0
        %1466 = vmatprep.subr.bf16.mxu0 0
        %1467 = vmatpush2.bf16.msra.mxu0 0
        %1468 = vmatprep.subr.bf16.mxu0 0
        %1469 = vmatpush2.bf16.msra.mxu0 0
        %1470 = vmatprep.mubr.bf16.mxu0 0
        %1471 = vmatmul.mubr.bf16.gmra.mxu0 %v1436
        %v1472 = vpop.f32.mrf.mxu0
        %v1473 = vadd.f32 0.0, %v1472
        %v1474 = vpop.f32.mrf.mxu0
        %v1475 = vpop.f32.mrf.mxu0
        %v1476 = vpop.f32.mrf.mxu0
        %1477 = vdwg.mxu0
        %v1478 = vtanh.pop %v1473
        %v1479 = vlaneseq
        %v1480 = vshrl.u32 %v1479, 7
        %v1481 = vsub.s32 0, %v1480
        %v1482 = vrot.slane %v1478, %v1481
        %v1483 = vmul.f32 %v991, %v1482
        %v1484 = vmul.f32 %v992, %v1482
        %v1485 = vsel %vm1390, %v1483, 0.0
        %1486 = vadd.xlane.f32.xlu0 %v1485
        %v1487 = vpop.xlane.xlu0 %1486
        %v1488 = vsel %vm1390, %v1484, 0.0
        %1489 = vadd.xlane.f32.xlu0 %v1488
        %v1490 = vpop.xlane.xlu0 %1489
        %v1491 = vsub.f32 0.0, %v1487
        %v1492 = vsub.f32 0.0, %v1490
        %v1493 = vmul.f32 %v1491, 1.442695
        %v1494 = vpow.pop %v1493
        %v1495 = vmul.f32 %v1492, 1.442695
        %v1496 = vpow.pop %v1495
        %v1497 = vadd.f32 %v1494, 1.0
        %v1498 = vadd.f32 %v1496, 1.0
        %v1499 = vrcp.pop %v1497
        %v1500 = vmul.f32 1.0, %v1499
        %v1501 = vrcp.pop %v1498
        %v1502 = vmul.f32 1.0, %v1501
        %v1503 = vmul.f32 %v1500, %v991
        %v1504 = vmul.f32 %v1502, %v992
        %v1505 = vmul.f32 %v1503, %v974
        %v1506 = vmul.f32 %v1504, %v979
        %v1507 = vsel %vm1390, %v1505, 0.0
        %v1508 = vsel %vm1390, %v1506, 0.0
        %v1509 = vadd.f32 %v1507, %v1508
        %v1510 = vrot.slane %v1509, 4
        %v1511 = vadd.f32 %v1509, %v1510
        %v1512 = vrot.slane %v1511, 2
        %v1513 = vadd.f32 %v1511, %v1512
        %v1514 = vrot.slane %v1513, 1
        %v1515 = vadd.f32 %v1513, %v1514
        %v1516 = vld [vmem:[%s783] sm:$0x1]
        %v1517 = vld [vmem:[%s18] sm:$0xf]
        %v1518 = vld [vmem:[%s18 + $0x4] sm:$0xf]
        %v1519 = vld [vmem:[%s18 + $0x8] sm:$0xf]
        %v1520 = vld [vmem:[%s18 + $0xc] sm:$0xf]
        %v1521 = vld [vmem:[%s18 + $0x10] sm:$0xf]
        %v1522 = vld [vmem:[%s18 + $0x14] sm:$0xf]
        %v1523 = vld [vmem:[%s18 + $0x18] sm:$0xf]
        %v1524 = vld [vmem:[%s18 + $0x1c] sm:$0xf]
        %v1525 = vmul.f32 %v989, %v900
        %v1526 = vmul.f32 %v990, %v905
        %v1527 = vsel %vm1390, %v1525, 0.0
        %v1528 = vsel %vm1390, %v1526, 0.0
        %v1529 = vadd.f32 %v1527, %v1528
        %v1530 = vrot.slane %v1529, 4
        %v1531 = vadd.f32 %v1529, %v1530
        %v1532 = vrot.slane %v1531, 2
        %v1533 = vadd.f32 %v1531, %v1532
        %v1534 = vrot.slane %v1533, 1
        %v1535 = vadd.f32 %v1533, %v1534
        %1537 = vset.pattern.permute.xlu0 0
        %1538 = vperm.xlu0 %1537, %v1516
        %v1539 = vpop.permute.xlu0 %1538
        %v1541 = vlaneseq
        %v1542 = vshrl.u32 %v1541, 7
        %v1543 = vsub.s32 0, %v1542
        %v1544 = vrot.slane %v1539, %v1543
        %v1545 = vmul.f32 %v1535, %v1544
        %v1546 = vpack.c.bf16 %v1545, %v1545
        %v1555 = vunpack.c.l.b16 %v1517
        %v1556 = vunpack.c.l.b16 %v1518
        %v1557 = vunpack.c.l.b16 %v1519
        %v1558 = vunpack.c.l.b16 %v1520
        %v1559 = vunpack.c.l.b16 %v1521
        %v1560 = vunpack.c.l.b16 %v1522
        %v1561 = vunpack.c.l.b16 %v1523
        %v1562 = vunpack.c.l.b16 %v1524
        %v1563 = vpack.c.b16 %v1556, %v1555
        %v1564 = vpack.c.b16 %v1558, %v1557
        %v1565 = vpack.c.b16 %v1560, %v1559
        %v1566 = vpack.c.b16 %v1562, %v1561
        %v1572 = vsel %vm1390, %v1546, 0
        %1574 = vmatprep.subr.bf16.mxu0 0
        %1575 = vmatpush1.bf16.msra.mxu0 0
        %1576 = vmatprep.subr.bf16.mxu0 0
        %1577 = vmatpush1.bf16.msra.mxu0 0
        %1578 = vmatprep.subr.bf16.mxu0 0
        %1579 = vmatpush1.bf16.msra.mxu0 0
        %1580 = vmatprep.subr.bf16.mxu0 0
        %1581 = vmatpush1.bf16.msra.mxu0 0
        %1582 = vmatprep.subr.bf16.mxu0 0
        %1583 = vmatpush1.bf16.msra.mxu0 %v1566
        %1584 = vmatprep.subr.bf16.mxu0 0
        %1585 = vmatpush1.bf16.msra.mxu0 %v1565
        %1586 = vmatprep.subr.bf16.mxu0 0
        %1587 = vmatpush1.bf16.msra.mxu0 %v1564
        %1588 = vmatprep.subr.bf16.mxu0 0
        %1589 = vmatpush1.bf16.msra.mxu0 %v1563
        %1590 = vmatprep.subr.bf16.mxu0 0
        %1591 = vmatpush2.bf16.msra.mxu0 0
        %1592 = vmatprep.subr.bf16.mxu0 0
        %1593 = vmatpush2.bf16.msra.mxu0 0
        %1594 = vmatprep.subr.bf16.mxu0 0
        %1595 = vmatpush2.bf16.msra.mxu0 0
        %1596 = vmatprep.subr.bf16.mxu0 0
        %1597 = vmatpush2.bf16.msra.mxu0 0
        %1598 = vmatprep.subr.bf16.mxu0 0
        %1599 = vmatpush2.bf16.msra.mxu0 0
        %1600 = vmatprep.subr.bf16.mxu0 0
        %1601 = vmatpush2.bf16.msra.mxu0 0
        %1602 = vmatprep.subr.bf16.mxu0 0
        %1603 = vmatpush2.bf16.msra.mxu0 0
        %1604 = vmatprep.subr.bf16.mxu0 0
        %1605 = vmatpush2.bf16.msra.mxu0 0
        %1606 = vmatprep.mubr.bf16.mxu0 0
        %1607 = vmatmul.mubr.bf16.gmra.mxu0 %v1572
        %v1608 = vpop.f32.mrf.mxu0
        %v1609 = vadd.f32 0.0, %v1608
        %v1610 = vpop.f32.mrf.mxu0
        %v1611 = vpop.f32.mrf.mxu0
        %v1612 = vpop.f32.mrf.mxu0
        %1613 = vdwg.mxu0
        %v1614 = vtanh.pop %v1609
        %v1615 = vlaneseq
        %v1616 = vshrl.u32 %v1615, 7
        %v1617 = vsub.s32 0, %v1616
        %v1618 = vrot.slane %v1614, %v1617
        %v1619 = vmul.f32 %v989, %v1618
        %v1620 = vmul.f32 %v990, %v1618
        %v1621 = vsel %vm1390, %v1619, 0.0
        %1622 = vadd.xlane.f32.xlu0 %v1621
        %v1623 = vpop.xlane.xlu0 %1622
        %v1624 = vsel %vm1390, %v1620, 0.0
        %1625 = vadd.xlane.f32.xlu0 %v1624
        %v1626 = vpop.xlane.xlu0 %1625
        %v1627 = vsub.f32 0.0, %v1623
        %v1628 = vsub.f32 0.0, %v1626
        %v1629 = vmul.f32 %v1627, 1.442695
        %v1630 = vpow.pop %v1629
        %v1631 = vmul.f32 %v1628, 1.442695
        %v1632 = vpow.pop %v1631
        %v1633 = vadd.f32 %v1630, 1.0
        %v1634 = vadd.f32 %v1632, 1.0
        %v1635 = vrcp.pop %v1633
        %v1636 = vmul.f32 1.0, %v1635
        %v1637 = vrcp.pop %v1634
        %v1638 = vmul.f32 1.0, %v1637
        %v1639 = vmul.f32 %v1636, %v989
        %v1640 = vmul.f32 %v1638, %v990
        %v1641 = vmul.f32 %v1639, %v900
        %v1642 = vmul.f32 %v1640, %v905
        %v1643 = vsel %vm1390, %v1641, 0.0
        %v1644 = vsel %vm1390, %v1642, 0.0
        %v1645 = vadd.f32 %v1643, %v1644
        %v1646 = vrot.slane %v1645, 4
        %v1647 = vadd.f32 %v1645, %v1646
        %v1648 = vrot.slane %v1647, 2
        %v1649 = vadd.f32 %v1647, %v1648
        %v1650 = vrot.slane %v1649, 1
        %v1651 = vadd.f32 %v1649, %v1650
        %1653 = vrot.lane.b32.xlu0 %v1515, 64
        %v1654 = vpop.permute.xlu0 %1653
        %v1656 = vsel %vm1390, %v991, %v1654
        %v1657 = vsel %vm1390, %v992, %v1654
        %1658 = vst [vmem:[%s738] sm:$0xff] %v1656
        %1659 = vst [vmem:[%s738 + $0x8] sm:$0xff] %v1657
        %1661 = vrot.lane.b32.xlu0 %v1651, 64
        %v1662 = vpop.permute.xlu0 %1661
        %v1664 = vsel %vm1390, %v989, %v1662
        %v1665 = vsel %vm1390, %v990, %v1662
        %1666 = vst [vmem:[%s745] sm:$0xff] %v1664
        %1667 = vst [vmem:[%s745 + $0x8] sm:$0xff] %v1665
        %s1668 = sand.u32 %s490, 1
        %s1669 = scalar_lea.sflag [#allocation3], %s1668
        %s1670 = sand.u32 %s490, 1
        %s1671 = smul.addr %s1670, 16
        %s1672 = scalar_lea.vmem [#allocation2], %s1671
        %s1673 = sand.u32 %s516, 1
        %s1674 = scalar_lea.sflag [#allocation5], %s1673
        %s1675 = sand.u32 %s516, 1
        %s1676 = smul.addr %s1675, 16
        %s1677 = scalar_lea.vmem [#allocation4], %s1676
        // Predicated region
        $region104: #{graph_encoder_forward.1} parent=95 // pred_check
          %p1678 = pneg %p500
        $region105: #{graph_encoder_forward.1} parent=95 // pred_check_branch
          %1680 = sbr.rel (%p1678) target = $region107
        $region106: #{graph_encoder_forward.1} parent=95 // pred_region
          %s1682 = ssub.s32 256, 256
          %1683 = vsyncadd %s1669, %s1682
          %s1684 = smul.addr %s38, 2
          %s1685 = smul.addr %s1684, 128
          %s1686 = scalar_lea.hbm %s19, %s1685
          %s1687 = sshll.u32 %s1672, 4
          %s1688 = int_to_ptr.vmem [resolvable:$true] %s1687
          %1693 = dma.vmem_to_hbm [thread:$0]  %s1688, 256, %s1686, %s1669, 128, 128, 8
        $region107: #{graph_encoder_forward.1} parent=95 // pred_fallthru
          _
        // Predicated region
        $region108: #{graph_encoder_forward.1} parent=95 // pred_check
          %p1694 = pneg %p526
        $region109: #{graph_encoder_forward.1} parent=95 // pred_check_branch
          %1696 = sbr.rel (%p1694) target = $region111
        $region110: #{graph_encoder_forward.1} parent=95 // pred_region
          %s1698 = ssub.s32 256, 256
          %1699 = vsyncadd %s1674, %s1698
          %s1700 = smul.addr %s38, 2
          %s1701 = smul.addr %s1700, 128
          %s1702 = scalar_lea.hbm %s20, %s1701
          %s1703 = sshll.u32 %s1677, 4
          %s1704 = int_to_ptr.vmem [resolvable:$true] %s1703
          %1709 = dma.vmem_to_hbm [thread:$0]  %s1704, 256, %s1702, %s1674, 128, 128, 8
        $region111: #{graph_encoder_forward.1} parent=95 // pred_fallthru
          _
      $region96: #{graph_encoder_forward.1} parent=5 // pred_fallthru
        _
      %p1710 = scmp.le.s32.totalorder 2, %s33
      // Predicated region
      $region112: #{graph_encoder_forward.1} parent=5 // pred_check
        %p1711 = pneg %p1710
      $region113: #{graph_encoder_forward.1} parent=5 // pred_check_branch
        %1713 = sbr.rel (%p1711) target = $region115
      $region114: #{graph_encoder_forward.1} parent=5 // pred_region
        %s1714 = ssub.s32 %s33, 2
        // Predicated region
        $region116: #{graph_encoder_forward.1} parent=114 // pred_check
          %p1715 = pneg %p506
        $region117: #{graph_encoder_forward.1} parent=114 // pred_check_branch
          %1717 = sbr.rel (%p1715) target = $region119
        $region118: #{graph_encoder_forward.1} parent=114 // pred_region
          %s1718 = sand.u32 %s491, 1
          %s1719 = scalar_lea.sflag [#allocation3], %s1718
          %s1720 = sand.u32 %s491, 1
          %s1721 = smul.addr %s1720, 16
          %s1722 = scalar_lea.vmem [#allocation2], %s1721
          %1723 = dma.done %s1719, 256
        $region119: #{graph_encoder_forward.1} parent=114 // pred_fallthru
          _
        // Predicated region
        $region120: #{graph_encoder_forward.1} parent=114 // pred_check
          %p1724 = pneg %p532
        $region121: #{graph_encoder_forward.1} parent=114 // pred_check_branch
          %1726 = sbr.rel (%p1724) target = $region123
        $region122: #{graph_encoder_forward.1} parent=114 // pred_region
          %s1727 = sand.u32 %s517, 1
          %s1728 = scalar_lea.sflag [#allocation5], %s1727
          %s1729 = sand.u32 %s517, 1
          %s1730 = smul.addr %s1729, 16
          %s1731 = scalar_lea.vmem [#allocation4], %s1730
          %1732 = dma.done %s1728, 256
        $region123: #{graph_encoder_forward.1} parent=114 // pred_fallthru
          _
      $region115: #{graph_encoder_forward.1} parent=5 // pred_fallthru
        _
    $region6: #{graph_encoder_forward.1} parent=1 // loop_footer
      %s37 = sadd.s32 1, %s33
    $region7: #{graph_encoder_forward.1} parent=1 // loop_footer_branch
      %32 = sbr.rel target = $region3
    $region8: #{graph_encoder_forward.1} parent=1 // loop_exit
      _
    %1733 = vsyncpa [#allocation3], 1
    %s1734 = scalar_lea.sflag [#allocation3], 1
    %1735 = vsyncpa %s1734, 1
    %1736 = vsyncpa [#allocation5], 1
    %s1737 = scalar_lea.sflag [#allocation5], 1
    %1738 = vsyncpa %s1737, 1

</llo_original>
